<compile_context>
chip_gen: v6e
topology: v6e:2x2x1
jax: 0.10.0
libtpu: 0.0.40
codegen_flags: <defaults>
</compile_context>

<pallas_src>
import math
import functools

import jax
import jax.numpy as jnp
import numpy as np
from jax import lax
from jax.experimental import pallas as pl
from jax.experimental.pallas import tpu as pltpu


def _attention_kernel(x_ref, maskb_ref, wqkv_ref, bqkv_ref, wp_ref, bp_ref,
                      o_ref, *, n_head: int):
    Bb, T, C = x_ref.shape
    hs = C // n_head

    # Flatten the Bb batch rows into the M dim of the projection matmul (leading-dim
    # merge only; minor (T, C) layout untouched).
    xf = x_ref[...].reshape(Bb * T, C)

    # Fused QKV projection: one (Bb*T, C) @ (C, 3C) MXU op, 96-lane output.
    # The attention scale 1/sqrt(hs) is already folded into the Q columns host-side.
    qkv = jnp.dot(xf, wqkv_ref[...], preferred_element_type=jnp.float32) + bqkv_ref[...]

    mask_bias = maskb_ref[...]          # (T, T): 0 where allowed, -1e30 where masked
    wp = wp_ref[...]                    # (C, C), loaded once
    bp = bp_ref[...]                    # (1, C)

    for b in range(Bb):                 # static unroll over batch rows in this block
        blk = qkv[b * T:(b + 1) * T, :]                                  # (T, 3C)
        acc = jnp.zeros((T, C), jnp.float32)
        for h in range(n_head):         # static unroll over heads
            qh = blk[:, h * hs:(h + 1) * hs]                             # (T, hs) (pre-scaled)
            kh = blk[:, C + h * hs:C + (h + 1) * hs]                     # (T, hs)
            vh = blk[:, 2 * C + h * hs:2 * C + (h + 1) * hs]             # (T, hs)

            # q @ k^T via dot_general contracting the last dims (no explicit transpose).
            s = lax.dot_general(qh, kh, (((1,), (1,)), ((), ())),
                                preferred_element_type=jnp.float32) + mask_bias
            m = jnp.max(s, axis=-1, keepdims=True)
            p = jnp.exp(s - m)          # masked entries underflow to exactly 0
            # exact reciprocal: approx=True (EUP vrcp) may not hold the 1e-4 tolerance
            att = p * pl.reciprocal(jnp.sum(p, axis=-1, keepdims=True), approx=False)

            yh = jnp.dot(att, vh, preferred_element_type=jnp.float32)    # (T, hs)
            # Fold output projection per head: concat_h(y_h) @ Wp == sum_h y_h @ Wp[h]
            acc = acc + jnp.dot(yh, wp[h * hs:(h + 1) * hs, :],
                                preferred_element_type=jnp.float32)      # (T, C)

        o_ref[b] = (acc + bp).astype(o_ref.dtype)


def causal_cross_conditional_self_attention(x, params, n_head):
    B, T, C = x.shape
    assert T % 10 == 0, "T must be divisible by 10 (tiled causal mask)"
    assert C % n_head == 0, "n_embd must be divisible by n_head"
    wq, bq, wk, bk, wv, bv, wp, bp = params

    hs = C // n_head
    scale = 1.0 / math.sqrt(hs)

    # Fuse QKV weights/biases into one wide matmul operand; fold the attention scale
    # into the Q columns so the kernel never scales the (T, T) score tiles.
    wqkv = jnp.concatenate([wq * scale, wk, wv], axis=1)   # (C, 3C)
    bqkv = jnp.concatenate([bq * scale, bk, bv], axis=1)   # (1, 3C)

    # Precompute the tiled-causal mask once: tril(t, t) tiled 10x10 over (T, T),
    # expressed as an additive bias (0 allowed, -1e30 masked; finite => NaN-safe).
    t = T // 10
    i = np.arange(T)
    allowed = (i[:, None] % t) >= (i[None, :] % t)
    mask_bias = jnp.asarray(np.where(allowed, 0.0, -1e30), dtype=jnp.float32)

    # 2 grid steps when B is even so v7x's second TensorCore gets work; otherwise 1.
    G = 2 if (B >= 2 and B % 2 == 0) else 1
    Bb = B // G

    return pl.pallas_call(
        functools.partial(_attention_kernel, n_head=n_head),
        out_shape=jax.ShapeDtypeStruct((B, T, C), x.dtype),
        grid_spec=pltpu.PrefetchScalarGridSpec(
            num_scalar_prefetch=0,
            grid=(G,),
            in_specs=[
                pl.BlockSpec((Bb, T, C), lambda g: (g, 0, 0)),   # x
                pl.BlockSpec((T, T), lambda g: (0, 0)),          # mask bias
                pl.BlockSpec((C, 3 * C), lambda g: (0, 0)),      # Wqkv (Q pre-scaled)
                pl.BlockSpec((1, 3 * C), lambda g: (0, 0)),      # bqkv (Q pre-scaled)
                pl.BlockSpec((C, C), lambda g: (0, 0)),          # Wproj
                pl.BlockSpec((1, C), lambda g: (0, 0)),          # bproj
            ],
            out_specs=pl.BlockSpec((Bb, T, C), lambda g: (g, 0, 0)),
        ),
        compiler_params=pltpu.CompilerParams(
            dimension_semantics=("parallel",)),
    )(x, mask_bias, wqkv, bqkv, wp, bp)


def _reference(x, params, n_head):
    """Pure-JAX reference matching the PyTorch forward (eval mode)."""
    B, T, C = x.shape
    hs = C // n_head
    t = T // 10
    wq, bq, wk, bk, wv, bv, wp, bp = params

    def lin(x, w, b):
        return x @ w + b[0]

    q = lin(x, wq, bq).reshape(B, T, n_head, hs).transpose(0, 2, 1, 3)
    k = lin(x, wk, bk).reshape(B, T, n_head, hs).transpose(0, 2, 1, 3)
    v = lin(x, wv, bv).reshape(B, T, n_head, hs).transpose(0, 2, 1, 3)

    att = jnp.einsum('bhtd,bhsd->bhts', q, k) * (1.0 / math.sqrt(hs))
    tril = jnp.tril(jnp.ones((t, t)))
    mask = jnp.tile(tril, (10, 10))
    att = jnp.where(mask == 0, -jnp.inf, att)
    att = jax.nn.softmax(att, axis=-1)
    y = jnp.einsum('bhts,bhsd->bhtd', att, v)
    y = y.transpose(0, 2, 1, 3).reshape(B, T, C)
    return lin(y, wp, bp)


def _init_params(key, C):
    """Deterministic PyTorch-Linear-style init: U(-1/sqrt(C), 1/sqrt(C))."""
    bound = 1.0 / math.sqrt(C)
    keys = jax.random.split(key, 8)
    params = []
    for i in range(4):  # query, key, value, proj
        w = jax.random.uniform(keys[2 * i], (C, C), jnp.float32, -bound, bound)
        b = jax.random.uniform(keys[2 * i + 1], (1, C), jnp.float32, -bound, bound)
        params += [w, b]
    return tuple(params)


if __name__ == "__main__":
    # config: n_embd=32, n_head=4, T must be divisible by 10.
    B, T, C, n_head = 2, 40, 32, 4

    root = jax.random.PRNGKey(0)
    kx, kp = jax.random.split(root)
    x = jax.random.normal(kx, (B, T, C), dtype=jnp.float32)
    params = _init_params(kp, C)

    out = causal_cross_conditional_self_attention(x, params, n_head)
    out = jax.block_until_ready(out)

    ref = _reference(x, params, n_head)
    np.testing.assert_allclose(np.asarray(out), np.asarray(ref), rtol=1e-4, atol=1e-4)

    print("KERNEL_OK")
</pallas_src>

<mosaic_0001>
module attributes {stable_mosaic.version = 11 : i64} {
  func.func @_attention_kernel(%arg0: i32, %arg1: memref<1x40x32xf32, #tpu.memory_space<vmem>>, %arg2: memref<40x40xf32, #tpu.memory_space<vmem>>, %arg3: memref<32x96xf32, #tpu.memory_space<vmem>>, %arg4: memref<1x96xf32, #tpu.memory_space<vmem>>, %arg5: memref<32x32xf32, #tpu.memory_space<vmem>>, %arg6: memref<1x32xf32, #tpu.memory_space<vmem>>, %arg7: memref<1x40x32xf32, #tpu.memory_space<vmem>>) attributes {dimension_semantics = [#tpu.dimension_semantics<parallel>], iteration_bounds = array<i64: 2>, scalar_prefetch = 0 : i64, scratch_operands = 0 : i64, tpu.core_type = #tpu.core_type<tc>, window_params = [{transform_indices = @transform_0, window_bounds = array<i64: 1, 40, 32>}, {pipeline_mode = #tpu.pipeline_mode<synchronous>, transform_indices = @transform_1, window_bounds = array<i64: 40, 40>}, {pipeline_mode = #tpu.pipeline_mode<synchronous>, transform_indices = @transform_2, window_bounds = array<i64: 32, 96>}, {pipeline_mode = #tpu.pipeline_mode<synchronous>, transform_indices = @transform_3, window_bounds = array<i64: 1, 96>}, {pipeline_mode = #tpu.pipeline_mode<synchronous>, transform_indices = @transform_4, window_bounds = array<i64: 32, 32>}, {pipeline_mode = #tpu.pipeline_mode<synchronous>, transform_indices = @transform_5, window_bounds = array<i64: 1, 32>}, {transform_indices = @transform_6, window_bounds = array<i64: 1, 40, 32>}]} {
    %c0 = arith.constant 0 : index
    %c0_0 = arith.constant 0 : index
    %c0_1 = arith.constant 0 : index
    %0 = vector.load %arg1[%c0, %c0_0, %c0_1] : memref<1x40x32xf32, #tpu.memory_space<vmem>>, vector<1x40x32xf32>
    %1 = vector.shape_cast %0 : vector<1x40x32xf32> to vector<40x32xf32>
    %c0_2 = arith.constant 0 : index
    %c0_3 = arith.constant 0 : index
    %2 = vector.load %arg3[%c0_2, %c0_3] : memref<32x96xf32, #tpu.memory_space<vmem>>, vector<32x96xf32>
    %cst = arith.constant dense<0.000000e+00> : vector<40x96xf32>
    %3 = tpu.matmul %1, %2, %cst {dimension_numbers = #tpu.dot_dimension_numbers<[1], [0], [0], [1], [0, 0, 1, 1], [], []>} : vector<40x32xf32>, vector<32x96xf32>, vector<40x96xf32> -> vector<40x96xf32>
    %c0_4 = arith.constant 0 : index
    %c0_5 = arith.constant 0 : index
    %4 = vector.load %arg4[%c0_4, %c0_5] : memref<1x96xf32, #tpu.memory_space<vmem>>, vector<1x96xf32>
    %5 = vector.broadcast %4 : vector<1x96xf32> to vector<40x96xf32>
    %6 = arith.addf %3, %5 : vector<40x96xf32>
    %c0_6 = arith.constant 0 : index
    %c0_7 = arith.constant 0 : index
    %7 = vector.load %arg2[%c0_6, %c0_7] : memref<40x40xf32, #tpu.memory_space<vmem>>, vector<40x40xf32>
    %c0_8 = arith.constant 0 : index
    %c0_9 = arith.constant 0 : index
    %8 = vector.load %arg5[%c0_8, %c0_9] : memref<32x32xf32, #tpu.memory_space<vmem>>, vector<32x32xf32>
    %c0_10 = arith.constant 0 : index
    %c0_11 = arith.constant 0 : index
    %9 = vector.load %arg6[%c0_10, %c0_11] : memref<1x32xf32, #tpu.memory_space<vmem>>, vector<1x32xf32>
    %cst_12 = arith.constant 0.000000e+00 : f32
    %10 = vector.broadcast %cst_12 : f32 to vector<40x32xf32>
    %11 = vector.extract_strided_slice %6 {offsets = [0, 0], sizes = [40, 8], strides = [1, 1]} : vector<40x96xf32> to vector<40x8xf32>
    %12 = vector.extract_strided_slice %6 {offsets = [0, 32], sizes = [40, 8], strides = [1, 1]} : vector<40x96xf32> to vector<40x8xf32>
    %13 = vector.extract_strided_slice %6 {offsets = [0, 64], sizes = [40, 8], strides = [1, 1]} : vector<40x96xf32> to vector<40x8xf32>
    %cst_13 = arith.constant dense<0.000000e+00> : vector<40x40xf32>
    %14 = tpu.matmul %11, %12, %cst_13 {dimension_numbers = #tpu.dot_dimension_numbers<[1], [1], [0], [0], [0, 0, 1, 0], [], []>} : vector<40x8xf32>, vector<40x8xf32>, vector<40x40xf32> -> vector<40x40xf32>
    %15 = arith.addf %14, %7 : vector<40x40xf32>
    %cst_14 = arith.constant dense<0xFF800000> : vector<40xf32>
    %16 = vector.multi_reduction <maximumf>, %15, %cst_14 [1] : vector<40x40xf32> to vector<40xf32>
    %17 = vector.shape_cast %16 : vector<40xf32> to vector<40x1xf32>
    %18 = vector.broadcast %17 : vector<40x1xf32> to vector<40x40xf32>
    %19 = arith.subf %15, %18 : vector<40x40xf32>
    %20 = math.exp %19 : vector<40x40xf32>
    %cst_15 = arith.constant dense<0.000000e+00> : vector<40xf32>
    %21 = vector.multi_reduction <add>, %20, %cst_15 [1] : vector<40x40xf32> to vector<40xf32>
    %22 = vector.shape_cast %21 : vector<40xf32> to vector<40x1xf32>
    %23 = tpu.reciprocal %22 : vector<40x1xf32> -> vector<40x1xf32>
    %24 = vector.broadcast %23 : vector<40x1xf32> to vector<40x40xf32>
    %25 = arith.mulf %20, %24 : vector<40x40xf32>
    %cst_16 = arith.constant dense<0.000000e+00> : vector<40x8xf32>
    %26 = tpu.matmul %25, %13, %cst_16 {dimension_numbers = #tpu.dot_dimension_numbers<[1], [0], [0], [1], [0, 0, 1, 1], [], []>} : vector<40x40xf32>, vector<40x8xf32>, vector<40x8xf32> -> vector<40x8xf32>
    %27 = vector.extract_strided_slice %8 {offsets = [0, 0], sizes = [8, 32], strides = [1, 1]} : vector<32x32xf32> to vector<8x32xf32>
    %cst_17 = arith.constant dense<0.000000e+00> : vector<40x32xf32>
    %28 = tpu.matmul %26, %27, %cst_17 {dimension_numbers = #tpu.dot_dimension_numbers<[1], [0], [0], [1], [0, 0, 1, 1], [], []>} : vector<40x8xf32>, vector<8x32xf32>, vector<40x32xf32> -> vector<40x32xf32>
    %29 = arith.addf %10, %28 : vector<40x32xf32>
    %30 = vector.extract_strided_slice %6 {offsets = [0, 8], sizes = [40, 8], strides = [1, 1]} : vector<40x96xf32> to vector<40x8xf32>
    %31 = vector.extract_strided_slice %6 {offsets = [0, 40], sizes = [40, 8], strides = [1, 1]} : vector<40x96xf32> to vector<40x8xf32>
    %32 = vector.extract_strided_slice %6 {offsets = [0, 72], sizes = [40, 8], strides = [1, 1]} : vector<40x96xf32> to vector<40x8xf32>
    %cst_18 = arith.constant dense<0.000000e+00> : vector<40x40xf32>
    %33 = tpu.matmul %30, %31, %cst_18 {dimension_numbers = #tpu.dot_dimension_numbers<[1], [1], [0], [0], [0, 0, 1, 0], [], []>} : vector<40x8xf32>, vector<40x8xf32>, vector<40x40xf32> -> vector<40x40xf32>
    %34 = arith.addf %33, %7 : vector<40x40xf32>
    %cst_19 = arith.constant dense<0xFF800000> : vector<40xf32>
    %35 = vector.multi_reduction <maximumf>, %34, %cst_19 [1] : vector<40x40xf32> to vector<40xf32>
    %36 = vector.shape_cast %35 : vector<40xf32> to vector<40x1xf32>
    %37 = vector.broadcast %36 : vector<40x1xf32> to vector<40x40xf32>
    %38 = arith.subf %34, %37 : vector<40x40xf32>
    %39 = math.exp %38 : vector<40x40xf32>
    %cst_20 = arith.constant dense<0.000000e+00> : vector<40xf32>
    %40 = vector.multi_reduction <add>, %39, %cst_20 [1] : vector<40x40xf32> to vector<40xf32>
    %41 = vector.shape_cast %40 : vector<40xf32> to vector<40x1xf32>
    %42 = tpu.reciprocal %41 : vector<40x1xf32> -> vector<40x1xf32>
    %43 = vector.broadcast %42 : vector<40x1xf32> to vector<40x40xf32>
    %44 = arith.mulf %39, %43 : vector<40x40xf32>
    %cst_21 = arith.constant dense<0.000000e+00> : vector<40x8xf32>
    %45 = tpu.matmul %44, %32, %cst_21 {dimension_numbers = #tpu.dot_dimension_numbers<[1], [0], [0], [1], [0, 0, 1, 1], [], []>} : vector<40x40xf32>, vector<40x8xf32>, vector<40x8xf32> -> vector<40x8xf32>
    %46 = vector.extract_strided_slice %8 {offsets = [8, 0], sizes = [8, 32], strides = [1, 1]} : vector<32x32xf32> to vector<8x32xf32>
    %cst_22 = arith.constant dense<0.000000e+00> : vector<40x32xf32>
    %47 = tpu.matmul %45, %46, %cst_22 {dimension_numbers = #tpu.dot_dimension_numbers<[1], [0], [0], [1], [0, 0, 1, 1], [], []>} : vector<40x8xf32>, vector<8x32xf32>, vector<40x32xf32> -> vector<40x32xf32>
    %48 = arith.addf %29, %47 : vector<40x32xf32>
    %49 = vector.extract_strided_slice %6 {offsets = [0, 16], sizes = [40, 8], strides = [1, 1]} : vector<40x96xf32> to vector<40x8xf32>
    %50 = vector.extract_strided_slice %6 {offsets = [0, 48], sizes = [40, 8], strides = [1, 1]} : vector<40x96xf32> to vector<40x8xf32>
    %51 = vector.extract_strided_slice %6 {offsets = [0, 80], sizes = [40, 8], strides = [1, 1]} : vector<40x96xf32> to vector<40x8xf32>
    %cst_23 = arith.constant dense<0.000000e+00> : vector<40x40xf32>
    %52 = tpu.matmul %49, %50, %cst_23 {dimension_numbers = #tpu.dot_dimension_numbers<[1], [1], [0], [0], [0, 0, 1, 0], [], []>} : vector<40x8xf32>, vector<40x8xf32>, vector<40x40xf32> -> vector<40x40xf32>
    %53 = arith.addf %52, %7 : vector<40x40xf32>
    %cst_24 = arith.constant dense<0xFF800000> : vector<40xf32>
    %54 = vector.multi_reduction <maximumf>, %53, %cst_24 [1] : vector<40x40xf32> to vector<40xf32>
    %55 = vector.shape_cast %54 : vector<40xf32> to vector<40x1xf32>
    %56 = vector.broadcast %55 : vector<40x1xf32> to vector<40x40xf32>
    %57 = arith.subf %53, %56 : vector<40x40xf32>
    %58 = math.exp %57 : vector<40x40xf32>
    %cst_25 = arith.constant dense<0.000000e+00> : vector<40xf32>
    %59 = vector.multi_reduction <add>, %58, %cst_25 [1] : vector<40x40xf32> to vector<40xf32>
    %60 = vector.shape_cast %59 : vector<40xf32> to vector<40x1xf32>
    %61 = tpu.reciprocal %60 : vector<40x1xf32> -> vector<40x1xf32>
    %62 = vector.broadcast %61 : vector<40x1xf32> to vector<40x40xf32>
    %63 = arith.mulf %58, %62 : vector<40x40xf32>
    %cst_26 = arith.constant dense<0.000000e+00> : vector<40x8xf32>
    %64 = tpu.matmul %63, %51, %cst_26 {dimension_numbers = #tpu.dot_dimension_numbers<[1], [0], [0], [1], [0, 0, 1, 1], [], []>} : vector<40x40xf32>, vector<40x8xf32>, vector<40x8xf32> -> vector<40x8xf32>
    %65 = vector.extract_strided_slice %8 {offsets = [16, 0], sizes = [8, 32], strides = [1, 1]} : vector<32x32xf32> to vector<8x32xf32>
    %cst_27 = arith.constant dense<0.000000e+00> : vector<40x32xf32>
    %66 = tpu.matmul %64, %65, %cst_27 {dimension_numbers = #tpu.dot_dimension_numbers<[1], [0], [0], [1], [0, 0, 1, 1], [], []>} : vector<40x8xf32>, vector<8x32xf32>, vector<40x32xf32> -> vector<40x32xf32>
    %67 = arith.addf %48, %66 : vector<40x32xf32>
    %68 = vector.extract_strided_slice %6 {offsets = [0, 24], sizes = [40, 8], strides = [1, 1]} : vector<40x96xf32> to vector<40x8xf32>
    %69 = vector.extract_strided_slice %6 {offsets = [0, 56], sizes = [40, 8], strides = [1, 1]} : vector<40x96xf32> to vector<40x8xf32>
    %70 = vector.extract_strided_slice %6 {offsets = [0, 88], sizes = [40, 8], strides = [1, 1]} : vector<40x96xf32> to vector<40x8xf32>
    %cst_28 = arith.constant dense<0.000000e+00> : vector<40x40xf32>
    %71 = tpu.matmul %68, %69, %cst_28 {dimension_numbers = #tpu.dot_dimension_numbers<[1], [1], [0], [0], [0, 0, 1, 0], [], []>} : vector<40x8xf32>, vector<40x8xf32>, vector<40x40xf32> -> vector<40x40xf32>
    %72 = arith.addf %71, %7 : vector<40x40xf32>
    %cst_29 = arith.constant dense<0xFF800000> : vector<40xf32>
    %73 = vector.multi_reduction <maximumf>, %72, %cst_29 [1] : vector<40x40xf32> to vector<40xf32>
    %74 = vector.shape_cast %73 : vector<40xf32> to vector<40x1xf32>
    %75 = vector.broadcast %74 : vector<40x1xf32> to vector<40x40xf32>
    %76 = arith.subf %72, %75 : vector<40x40xf32>
    %77 = math.exp %76 : vector<40x40xf32>
    %cst_30 = arith.constant dense<0.000000e+00> : vector<40xf32>
    %78 = vector.multi_reduction <add>, %77, %cst_30 [1] : vector<40x40xf32> to vector<40xf32>
    %79 = vector.shape_cast %78 : vector<40xf32> to vector<40x1xf32>
    %80 = tpu.reciprocal %79 : vector<40x1xf32> -> vector<40x1xf32>
    %81 = vector.broadcast %80 : vector<40x1xf32> to vector<40x40xf32>
    %82 = arith.mulf %77, %81 : vector<40x40xf32>
    %cst_31 = arith.constant dense<0.000000e+00> : vector<40x8xf32>
    %83 = tpu.matmul %82, %70, %cst_31 {dimension_numbers = #tpu.dot_dimension_numbers<[1], [0], [0], [1], [0, 0, 1, 1], [], []>} : vector<40x40xf32>, vector<40x8xf32>, vector<40x8xf32> -> vector<40x8xf32>
    %84 = vector.extract_strided_slice %8 {offsets = [24, 0], sizes = [8, 32], strides = [1, 1]} : vector<32x32xf32> to vector<8x32xf32>
    %cst_32 = arith.constant dense<0.000000e+00> : vector<40x32xf32>
    %85 = tpu.matmul %83, %84, %cst_32 {dimension_numbers = #tpu.dot_dimension_numbers<[1], [0], [0], [1], [0, 0, 1, 1], [], []>} : vector<40x8xf32>, vector<8x32xf32>, vector<40x32xf32> -> vector<40x32xf32>
    %86 = arith.addf %67, %85 : vector<40x32xf32>
    %87 = vector.broadcast %9 : vector<1x32xf32> to vector<40x32xf32>
    %88 = arith.addf %86, %87 : vector<40x32xf32>
    %c0_33 = arith.constant 0 : index
    %c0_34 = arith.constant 0 : index
    %c0_35 = arith.constant 0 : index
    %89 = vector.load %arg7[%c0_33, %c0_34, %c0_35] : memref<1x40x32xf32, #tpu.memory_space<vmem>>, vector<1x40x32xf32>
    %90 = vector.shape_cast %89 : vector<1x40x32xf32> to vector<40x32xf32>
    %91 = vector.shape_cast %88 : vector<40x32xf32> to vector<1x40x32xf32>
    tpu.vector_store %arg7[%c0_33, %c0_34, %c0_35], %91 {strides = array<i32>} : memref<1x40x32xf32, #tpu.memory_space<vmem>>, vector<1x40x32xf32>,
    return
  }
  func.func @transform_0(%arg0: i32) -> (i32, i32, i32) {
    %c0_i32 = arith.constant 0 : i32
    %c0_i32_0 = arith.constant 0 : i32
    %c0_i32_1 = arith.constant 0 : i32
    return %arg0, %c0_i32, %c0_i32_0 : i32, i32, i32
  }
  func.func @transform_1(%arg0: i32) -> (i32, i32) {
    %c0_i32 = arith.constant 0 : i32
    %c0_i32_0 = arith.constant 0 : i32
    %c0_i32_1 = arith.constant 0 : i32
    return %c0_i32, %c0_i32_0 : i32, i32
  }
  func.func @transform_2(%arg0: i32) -> (i32, i32) {
    %c0_i32 = arith.constant 0 : i32
    %c0_i32_0 = arith.constant 0 : i32
    %c0_i32_1 = arith.constant 0 : i32
    return %c0_i32, %c0_i32_0 : i32, i32
  }
  func.func @transform_3(%arg0: i32) -> (i32, i32) {
    %c0_i32 = arith.constant 0 : i32
    %c0_i32_0 = arith.constant 0 : i32
    %c0_i32_1 = arith.constant 0 : i32
    return %c0_i32, %c0_i32_0 : i32, i32
  }
  func.func @transform_4(%arg0: i32) -> (i32, i32) {
    %c0_i32 = arith.constant 0 : i32
    %c0_i32_0 = arith.constant 0 : i32
    %c0_i32_1 = arith.constant 0 : i32
    return %c0_i32, %c0_i32_0 : i32, i32
  }
  func.func @transform_5(%arg0: i32) -> (i32, i32) {
    %c0_i32 = arith.constant 0 : i32
    %c0_i32_0 = arith.constant 0 : i32
    %c0_i32_1 = arith.constant 0 : i32
    return %c0_i32, %c0_i32_0 : i32, i32
  }
  func.func @transform_6(%arg0: i32) -> (i32, i32, i32) {
    %c0_i32 = arith.constant 0 : i32
    %c0_i32_0 = arith.constant 0 : i32
    %c0_i32_1 = arith.constant 0 : i32
    return %arg0, %c0_i32, %c0_i32_0 : i32, i32, i32
  }
}

</mosaic_0001>

<llo_original>
// kernel: tpu_custom_call.1
$region0: #{tpu_custom_call.1}
  #allocation0 [shape = 'u32[]', space=smem, size = 0x4, offset = 0x4, fixed_abs, tag = 'smem constant byte address 0x4 - core index']
  #allocation1 [shape = 'u32[144,128]{1,0:T(1,128)}', space=vmem, size = 0x12000, scoped, tag = 'internal scratch']
  %s0 = inlined_call_operand.vmem [shape: f32[2,40,32], index: 0, kind: input, shape index: {}]
  %s1 = inlined_call_operand.vmem [shape: f32[40,40], index: 1, kind: input, shape index: {}]
  %s2 = inlined_call_operand.vmem [shape: f32[32,96], index: 2, kind: input, shape index: {}]
  %s3 = inlined_call_operand.vmem [shape: f32[1,96], index: 3, kind: input, shape index: {}]
  %s4 = inlined_call_operand.vmem [shape: f32[32,32], index: 4, kind: input, shape index: {}]
  %s5 = inlined_call_operand.vmem [shape: f32[1,32], index: 5, kind: input, shape index: {}]
  %s6 = inlined_call_operand.vmem [shape: f32[2,40,32], index: 6, kind: output, shape index: {}]
  %s7 = sld [smem:[#allocation0]]
  $region57: #{tpu_custom_call.1} parent=0
    _
  %s9 = ssub.s32 1, %s7
  %s10 = scalar_select 0, %s9, %s7
  loop: start=0, step=1, limit=4
  $region2: #{tpu_custom_call.1} parent=0 // loop_pre_header
    _
  $region3: #{tpu_custom_call.1} parent=0 // loop_header
    %s12 = sphi 0, %s16
    %p13 = scmp.ge.s32.totalorder %s12, 4
    %s22 = sphi 0, %s24
    %s25 = sphi 0, %s22
    %s26 = sphi 0, %s25
    %s42 = sphi 0, %s26
    %s46 = sphi 0, %s46
    %s48 = sphi 0, %s46
    %s49 = sphi 0, %s48
    %s63 = sphi 0, %s49
    %s67 = sphi 0, %s67
    %s69 = sphi 0, %s67
    %s70 = sphi 0, %s69
    %s84 = sphi 0, %s70
    %s88 = sphi 0, %s88
    %s90 = sphi 0, %s88
    %s91 = sphi 0, %s90
    %s105 = sphi 0, %s91
    %s109 = sphi 0, %s109
    %s111 = sphi 0, %s109
    %s112 = sphi 0, %s111
    %s126 = sphi 0, %s112
    %s130 = sphi 0, %s130
    %s132 = sphi 0, %s130
    %s133 = sphi 0, %s132
    %s147 = sphi 0, %s133
    %s153 = sphi 0, %s155
    %s156 = sphi 0, %s153
    %s157 = sphi 0, %s156
    %s173 = sphi 0, %s157
  $region4: #{tpu_custom_call.1} parent=0 // loop_header_branch
    %15 = sbr.rel (%p13) target = $region8
  $region5: #{tpu_custom_call.1} parent=0 // loop_body
    %s17 = ssub.s32 %s12, 1
    %s18 = ssub.s32 %s12, 2
    %s19 = sadd.s32 %s12, 1
    %s20 = ssub.s32 %s12, %s19
    %p21 = scmp.eq.s32.totalorder %s20, 0
    %s23 = sadd.s32 %s22, 1
    %s24 = scalar_select %p21, %s22, %s23
    %p27 = pneg %p21
    %p28 = scmp.eq.s32.totalorder %s12, 1
    %p29 = por %p27, %p28
    %p30 = scmp.ne.s32.totalorder %s22, %s25
    %p31 = scmp.eq.s32.totalorder %s12, 0
    %p32 = por %p30, %p31
    %p33 = scmp.ne.s32.totalorder %s22, %s25
    %p34 = scmp.eq.s32.totalorder %s17, 1
    %p35 = por %p33, %p34
    %p36 = scmp.ne.s32.totalorder %s25, %s26
    %p37 = scmp.eq.s32.totalorder %s17, 0
    %p38 = por %p36, %p37
    %p39 = scmp.ne.s32.totalorder %s25, %s26
    %p40 = scmp.eq.s32.totalorder %s18, 1
    %p41 = por %p39, %p40
    %p43 = scmp.ne.s32.totalorder %s26, %s42
    %p44 = scmp.eq.s32.totalorder %s18, 0
    %p45 = por %p43, %p44
    %s47 = sadd.s32 %s46, 1
    %p50 = scmp.eq.s32.totalorder %s12, 1
    %p51 = scmp.ne.s32.totalorder %s46, %s48
    %p52 = scmp.eq.s32.totalorder %s12, 0
    %p53 = por %p51, %p52
    %p54 = scmp.ne.s32.totalorder %s46, %s48
    %p55 = scmp.eq.s32.totalorder %s17, 1
    %p56 = por %p54, %p55
    %p57 = scmp.ne.s32.totalorder %s48, %s49
    %p58 = scmp.eq.s32.totalorder %s17, 0
    %p59 = por %p57, %p58
    %p60 = scmp.ne.s32.totalorder %s48, %s49
    %p61 = scmp.eq.s32.totalorder %s18, 1
    %p62 = por %p60, %p61
    %p64 = scmp.ne.s32.totalorder %s49, %s63
    %p65 = scmp.eq.s32.totalorder %s18, 0
    %p66 = por %p64, %p65
    %s68 = sadd.s32 %s67, 1
    %p71 = scmp.eq.s32.totalorder %s12, 1
    %p72 = scmp.ne.s32.totalorder %s67, %s69
    %p73 = scmp.eq.s32.totalorder %s12, 0
    %p74 = por %p72, %p73
    %p75 = scmp.ne.s32.totalorder %s67, %s69
    %p76 = scmp.eq.s32.totalorder %s17, 1
    %p77 = por %p75, %p76
    %p78 = scmp.ne.s32.totalorder %s69, %s70
    %p79 = scmp.eq.s32.totalorder %s17, 0
    %p80 = por %p78, %p79
    %p81 = scmp.ne.s32.totalorder %s69, %s70
    %p82 = scmp.eq.s32.totalorder %s18, 1
    %p83 = por %p81, %p82
    %p85 = scmp.ne.s32.totalorder %s70, %s84
    %p86 = scmp.eq.s32.totalorder %s18, 0
    %p87 = por %p85, %p86
    %s89 = sadd.s32 %s88, 1
    %p92 = scmp.eq.s32.totalorder %s12, 1
    %p93 = scmp.ne.s32.totalorder %s88, %s90
    %p94 = scmp.eq.s32.totalorder %s12, 0
    %p95 = por %p93, %p94
    %p96 = scmp.ne.s32.totalorder %s88, %s90
    %p97 = scmp.eq.s32.totalorder %s17, 1
    %p98 = por %p96, %p97
    %p99 = scmp.ne.s32.totalorder %s90, %s91
    %p100 = scmp.eq.s32.totalorder %s17, 0
    %p101 = por %p99, %p100
    %p102 = scmp.ne.s32.totalorder %s90, %s91
    %p103 = scmp.eq.s32.totalorder %s18, 1
    %p104 = por %p102, %p103
    %p106 = scmp.ne.s32.totalorder %s91, %s105
    %p107 = scmp.eq.s32.totalorder %s18, 0
    %p108 = por %p106, %p107
    %s110 = sadd.s32 %s109, 1
    %p113 = scmp.eq.s32.totalorder %s12, 1
    %p114 = scmp.ne.s32.totalorder %s109, %s111
    %p115 = scmp.eq.s32.totalorder %s12, 0
    %p116 = por %p114, %p115
    %p117 = scmp.ne.s32.totalorder %s109, %s111
    %p118 = scmp.eq.s32.totalorder %s17, 1
    %p119 = por %p117, %p118
    %p120 = scmp.ne.s32.totalorder %s111, %s112
    %p121 = scmp.eq.s32.totalorder %s17, 0
    %p122 = por %p120, %p121
    %p123 = scmp.ne.s32.totalorder %s111, %s112
    %p124 = scmp.eq.s32.totalorder %s18, 1
    %p125 = por %p123, %p124
    %p127 = scmp.ne.s32.totalorder %s112, %s126
    %p128 = scmp.eq.s32.totalorder %s18, 0
    %p129 = por %p127, %p128
    %s131 = sadd.s32 %s130, 1
    %p134 = scmp.eq.s32.totalorder %s12, 1
    %p135 = scmp.ne.s32.totalorder %s130, %s132
    %p136 = scmp.eq.s32.totalorder %s12, 0
    %p137 = por %p135, %p136
    %p138 = scmp.ne.s32.totalorder %s130, %s132
    %p139 = scmp.eq.s32.totalorder %s17, 1
    %p140 = por %p138, %p139
    %p141 = scmp.ne.s32.totalorder %s132, %s133
    %p142 = scmp.eq.s32.totalorder %s17, 0
    %p143 = por %p141, %p142
    %p144 = scmp.ne.s32.totalorder %s132, %s133
    %p145 = scmp.eq.s32.totalorder %s18, 1
    %p146 = por %p144, %p145
    %p148 = scmp.ne.s32.totalorder %s133, %s147
    %p149 = scmp.eq.s32.totalorder %s18, 0
    %p150 = por %p148, %p149
    %s151 = ssub.s32 %s12, %s19
    %p152 = scmp.eq.s32.totalorder %s151, 0
    %s154 = sadd.s32 %s153, 1
    %s155 = scalar_select %p152, %s153, %s154
    %p158 = pneg %p152
    %p159 = scmp.eq.s32.totalorder %s12, 1
    %p160 = por %p158, %p159
    %p161 = scmp.ne.s32.totalorder %s153, %s156
    %p162 = scmp.eq.s32.totalorder %s12, 0
    %p163 = por %p161, %p162
    %p164 = scmp.ne.s32.totalorder %s153, %s156
    %p165 = scmp.eq.s32.totalorder %s17, 1
    %p166 = por %p164, %p165
    %p167 = scmp.ne.s32.totalorder %s156, %s157
    %p168 = scmp.eq.s32.totalorder %s17, 0
    %p169 = por %p167, %p168
    %p170 = scmp.ne.s32.totalorder %s156, %s157
    %p171 = scmp.eq.s32.totalorder %s18, 1
    %p172 = por %p170, %p171
    %p174 = scmp.ne.s32.totalorder %s157, %s173
    %p175 = scmp.eq.s32.totalorder %s18, 0
    %p176 = por %p174, %p175
    %p177 = scmp.le.s32.totalorder 1, %s12
    %p178 = scmp.lt.s32.totalorder %s12, 3
    %p179 = pnand %p177, %p178
    %p180 = pneg %p179
    // Predicated region
    $region9: #{tpu_custom_call.1} parent=5 // pred_check
      _
    $region10: #{tpu_custom_call.1} parent=5 // pred_check_branch
      %182 = sbr.rel (%p179) target = $region12
    $region11: #{tpu_custom_call.1} parent=5 // pred_region
      %s183 = ssub.s32 %s12, 1
      // Predicated region
      $region13: #{tpu_custom_call.1} parent=11 // pred_check
        %p184 = pneg %p59
      $region14: #{tpu_custom_call.1} parent=11 // pred_check_branch
        %186 = sbr.rel (%p184) target = $region16
      $region15: #{tpu_custom_call.1} parent=11 // pred_region
        _
      $region16: #{tpu_custom_call.1} parent=11 // pred_fallthru
        _
      // Predicated region
      $region17: #{tpu_custom_call.1} parent=11 // pred_check
        %p187 = pneg %p80
      $region18: #{tpu_custom_call.1} parent=11 // pred_check_branch
        %189 = sbr.rel (%p187) target = $region20
      $region19: #{tpu_custom_call.1} parent=11 // pred_region
        _
      $region20: #{tpu_custom_call.1} parent=11 // pred_fallthru
        _
      // Predicated region
      $region21: #{tpu_custom_call.1} parent=11 // pred_check
        %p190 = pneg %p101
      $region22: #{tpu_custom_call.1} parent=11 // pred_check_branch
        %192 = sbr.rel (%p190) target = $region24
      $region23: #{tpu_custom_call.1} parent=11 // pred_region
        _
      $region24: #{tpu_custom_call.1} parent=11 // pred_fallthru
        _
      // Predicated region
      $region25: #{tpu_custom_call.1} parent=11 // pred_check
        %p193 = pneg %p122
      $region26: #{tpu_custom_call.1} parent=11 // pred_check_branch
        %195 = sbr.rel (%p193) target = $region28
      $region27: #{tpu_custom_call.1} parent=11 // pred_region
        _
      $region28: #{tpu_custom_call.1} parent=11 // pred_fallthru
        _
      // Predicated region
      $region29: #{tpu_custom_call.1} parent=11 // pred_check
        %p196 = pneg %p143
      $region30: #{tpu_custom_call.1} parent=11 // pred_check_branch
        %198 = sbr.rel (%p196) target = $region32
      $region31: #{tpu_custom_call.1} parent=11 // pred_region
        _
      $region32: #{tpu_custom_call.1} parent=11 // pred_fallthru
        _
    $region12: #{tpu_custom_call.1} parent=5 // pred_fallthru
      _
    %p199 = scmp.lt.s32.totalorder %s12, 2
    // Predicated region
    $region33: #{tpu_custom_call.1} parent=5 // pred_check
      %p200 = pneg %p199
    $region34: #{tpu_custom_call.1} parent=5 // pred_check_branch
      %202 = sbr.rel (%p200) target = $region36
    $region35: #{tpu_custom_call.1} parent=5 // pred_region
      // Predicated region
      $region37: #{tpu_custom_call.1} parent=35 // pred_check
        %p203 = pneg %p32
      $region38: #{tpu_custom_call.1} parent=35 // pred_check_branch
        %205 = sbr.rel (%p203) target = $region40
      $region39: #{tpu_custom_call.1} parent=35 // pred_region
        %p206 = scmp.lt.s32.totalorder %s12, 1
        %s207 = scalar_select %p206, %s12, 1
        %s208 = smul.addr %s207, 5
        %s209 = smul.addr %s208, 8
        %s210 = scalar_lea.vmem %s0, %s209
      $region40: #{tpu_custom_call.1} parent=35 // pred_fallthru
        _
    $region36: #{tpu_custom_call.1} parent=5 // pred_fallthru
      _
    %p211 = scmp.le.s32.totalorder 1, %s12
    %p212 = scmp.lt.s32.totalorder %s12, 3
    %p213 = pnand %p211, %p212
    %p214 = pneg %p213
    // Predicated region
    $region41: #{tpu_custom_call.1} parent=5 // pred_check
      _
    $region42: #{tpu_custom_call.1} parent=5 // pred_check_branch
      %216 = sbr.rel (%p213) target = $region44
    $region43: #{tpu_custom_call.1} parent=5 // pred_region
      %s217 = ssub.s32 %s12, 1
      %p218 = scmp.lt.s32.totalorder %s17, 1
      %s219 = scalar_select %p218, %s17, 1
      %s220 = smul.addr %s219, 5
      %s221 = smul.addr %s220, 8
      %s222 = scalar_lea.vmem %s0, %s221
      %p223 = pneg %p38
      %p224 = pneg %p35
      %p225 = pneg %p59
      %p226 = pneg %p56
      %p227 = pneg %p80
      %p228 = pneg %p77
      %p229 = pneg %p101
      %p230 = pneg %p98
      %p231 = pneg %p122
      %p232 = pneg %p119
      %p233 = pneg %p143
      %p234 = pneg %p140
      %p235 = pneg %p169
      %p236 = pneg %p166
      %p237 = scmp.lt.s32.totalorder %s17, 1
      %s238 = scalar_select %p237, %s17, 1
      %s239 = smul.addr %s238, 5
      %s240 = smul.addr %s239, 8
      %s241 = scalar_lea.vmem %s6, %s240
      %p242 = scmp.lt.s32.totalorder %s17, 1
      %s243 = scalar_select %p242, %s17, 1
      %s244 = smul.addr %s243, 5
      %s245 = smul.addr %s244, 8
      %s246 = scalar_lea.vmem %s0, %s245
      %p247 = scmp.lt.s32.totalorder %s17, 1
      %s248 = scalar_select %p247, %s17, 1
      %s249 = smul.addr %s248, 5
      %s250 = smul.addr %s249, 8
      %s251 = scalar_lea.vmem %s6, %s250
      %v252 = vld [vmem:[%s246] sm:$0xff]
      %v253 = vld [vmem:[%s246 + $0x8] sm:$0xff]
      %v254 = vld [vmem:[%s246 + $0x10] sm:$0xff]
      %v255 = vld [vmem:[%s246 + $0x18] sm:$0xff]
      %v256 = vld [vmem:[%s246 + $0x20] sm:$0xff]
      %v257 = vld [vmem:[%s2] sm:$0xff]
      %v258 = vld [vmem:[%s2 + $0x8] sm:$0xff]
      %v259 = vld [vmem:[%s2 + $0x10] sm:$0xff]
      %v260 = vld [vmem:[%s2 + $0x18] sm:$0xff]
      %v261 = vld [vmem:[%s3] sm:$0x1]
      %v263 = vlaneseq
      %v264 = vshrl.u32 %v263, 7
      %v265 = vsub.s32 0, %v264
      %v266 = vrot.slane %v261, %v265
      %vm268 = vcmask 261120
      %v270 = vsel %vm268, %v252, 0
      %v273 = vsel %vm268, %v253, 0
      %v276 = vsel %vm268, %v254, 0
      %v279 = vsel %vm268, %v255, 0
      %v282 = vsel %vm268, %v256, 0
      %284 = vmatprep.subr.mxu0 0.0
      %285 = vmatpush1.msra.mxu0 0.0
      %286 = vmatprep.subr.mxu0 0.0
      %287 = vmatpush1.msra.mxu0 0.0
      %288 = vmatprep.subr.mxu0 0.0
      %289 = vmatpush1.msra.mxu0 0.0
      %290 = vmatprep.subr.mxu0 0.0
      %291 = vmatpush1.msra.mxu0 0.0
      %292 = vmatprep.subr.mxu0 0.0
      %293 = vmatpush1.msra.mxu0 0.0
      %294 = vmatprep.subr.mxu0 0.0
      %295 = vmatpush1.msra.mxu0 0.0
      %296 = vmatprep.subr.mxu0 0.0
      %297 = vmatpush1.msra.mxu0 0.0
      %298 = vmatprep.subr.mxu0 0.0
      %299 = vmatpush1.msra.mxu0 0.0
      %300 = vmatprep.subr.mxu0 0.0
      %301 = vmatpush1.msra.mxu0 0.0
      %302 = vmatprep.subr.mxu0 0.0
      %303 = vmatpush1.msra.mxu0 0.0
      %304 = vmatprep.subr.mxu0 0.0
      %305 = vmatpush1.msra.mxu0 0.0
      %306 = vmatprep.subr.mxu0 0.0
      %307 = vmatpush1.msra.mxu0 0.0
      %308 = vmatprep.subr.mxu0 0.0
      %309 = vmatpush1.msra.mxu0 %v260
      %310 = vmatprep.subr.mxu0 0.0
      %311 = vmatpush1.msra.mxu0 %v259
      %312 = vmatprep.subr.mxu0 0.0
      %313 = vmatpush1.msra.mxu0 %v258
      %314 = vmatprep.subr.mxu0 0.0
      %315 = vmatpush1.msra.mxu0 %v257
      %316 = vmatprep.subr.mxu0 0.0
      %317 = vmatpush2.msra.mxu0 0.0
      %318 = vmatprep.subr.mxu0 0.0
      %319 = vmatpush2.msra.mxu0 0.0
      %320 = vmatprep.subr.mxu0 0.0
      %321 = vmatpush2.msra.mxu0 0.0
      %322 = vmatprep.subr.mxu0 0.0
      %323 = vmatpush2.msra.mxu0 0.0
      %324 = vmatprep.subr.mxu0 0.0
      %325 = vmatpush2.msra.mxu0 0.0
      %326 = vmatprep.subr.mxu0 0.0
      %327 = vmatpush2.msra.mxu0 0.0
      %328 = vmatprep.subr.mxu0 0.0
      %329 = vmatpush2.msra.mxu0 0.0
      %330 = vmatprep.subr.mxu0 0.0
      %331 = vmatpush2.msra.mxu0 0.0
      %332 = vmatprep.subr.mxu0 0.0
      %333 = vmatpush2.msra.mxu0 0.0
      %334 = vmatprep.subr.mxu0 0.0
      %335 = vmatpush2.msra.mxu0 0.0
      %336 = vmatprep.subr.mxu0 0.0
      %337 = vmatpush2.msra.mxu0 0.0
      %338 = vmatprep.subr.mxu0 0.0
      %339 = vmatpush2.msra.mxu0 0.0
      %340 = vmatprep.subr.mxu0 0.0
      %341 = vmatpush2.msra.mxu0 0.0
      %342 = vmatprep.subr.mxu0 0.0
      %343 = vmatpush2.msra.mxu0 0.0
      %344 = vmatprep.subr.mxu0 0.0
      %345 = vmatpush2.msra.mxu0 0.0
      %346 = vmatprep.subr.mxu0 0.0
      %347 = vmatpush2.msra.mxu0 0.0
      %348 = vmatprep.mubr.f32.mxu0 0.0
      %349 = vmatmul.mubr.f32.gmra.mxu0 %v270
      %v350 = vpop.f32.mrf.mxu0
      %v351 = vadd.f32 %v266, %v350
      %v352 = vpop.f32.mrf.mxu0
      %353 = vmatprep.mubr.f32.mxu0 0.0
      %354 = vmatmul.mubr.f32.gmra.mxu0 %v273
      %v355 = vpop.f32.mrf.mxu0
      %v356 = vadd.f32 %v266, %v355
      %v357 = vpop.f32.mrf.mxu0
      %358 = vmatprep.mubr.f32.mxu0 0.0
      %359 = vmatmul.mubr.f32.gmra.mxu0 %v276
      %v360 = vpop.f32.mrf.mxu0
      %v361 = vadd.f32 %v266, %v360
      %v362 = vpop.f32.mrf.mxu0
      %363 = vmatprep.mubr.f32.mxu0 0.0
      %364 = vmatmul.mubr.f32.gmra.mxu0 %v279
      %v365 = vpop.f32.mrf.mxu0
      %v366 = vadd.f32 %v266, %v365
      %v367 = vpop.f32.mrf.mxu0
      %368 = vmatprep.mubr.f32.mxu0 0.0
      %369 = vmatmul.mubr.f32.gmra.mxu0 %v282
      %v370 = vpop.f32.mrf.mxu0
      %v371 = vadd.f32 %v266, %v370
      %v372 = vpop.f32.mrf.mxu0
      %373 = vdwg.mxu0
      %v374 = vld [vmem:[%s1] sm:$0xff]
      %v375 = vld [vmem:[%s1 + $0x8] sm:$0xff]
      %v376 = vld [vmem:[%s1 + $0x10] sm:$0xff]
      %v377 = vld [vmem:[%s1 + $0x18] sm:$0xff]
      %v378 = vld [vmem:[%s1 + $0x20] sm:$0xff]
      %v379 = vld [vmem:[%s4] sm:$0xff]
      %v380 = vld [vmem:[%s4 + $0x8] sm:$0xff]
      %v381 = vld [vmem:[%s4 + $0x10] sm:$0xff]
      %v382 = vld [vmem:[%s4 + $0x18] sm:$0xff]
      %v383 = vld [vmem:[%s5] sm:$0x1]
      %389 = vrot.lane.b32.xlu0 %v351, 96
      %v390 = vpop.permute.xlu0 %389
      %391 = vrot.lane.b32.xlu0 %v356, 96
      %v392 = vpop.permute.xlu0 %391
      %393 = vrot.lane.b32.xlu0 %v361, 96
      %v394 = vpop.permute.xlu0 %393
      %395 = vrot.lane.b32.xlu0 %v366, 96
      %v396 = vpop.permute.xlu0 %395
      %397 = vrot.lane.b32.xlu0 %v371, 96
      %v398 = vpop.permute.xlu0 %397
      %vm399 = vcmask 64512
      %v400 = vsel %vm399, %v351, 0
      %v402 = vsel %vm399, %v356, 0
      %v404 = vsel %vm399, %v361, 0
      %v406 = vsel %vm399, %v366, 0
      %v408 = vsel %vm399, %v371, 0
      %v410 = vsel %vm399, %v390, 0
      %v412 = vsel %vm399, %v392, 0
      %v414 = vsel %vm399, %v394, 0
      %v416 = vsel %vm399, %v396, 0
      %v418 = vsel %vm399, %v398, 0
      %420 = vmatprep.subr.mxu0 0.0
      %421 = vmatpush1.xpose.msra.mxu0 0.0
      %422 = vmatprep.subr.mxu0 0.0
      %423 = vmatpush1.xpose.msra.mxu0 0.0
      %424 = vmatprep.subr.mxu0 0.0
      %425 = vmatpush1.xpose.msra.mxu0 0.0
      %426 = vmatprep.subr.mxu0 0.0
      %427 = vmatpush1.xpose.msra.mxu0 0.0
      %428 = vmatprep.subr.mxu0 0.0
      %429 = vmatpush1.xpose.msra.mxu0 0.0
      %430 = vmatprep.subr.mxu0 0.0
      %431 = vmatpush1.xpose.msra.mxu0 0.0
      %432 = vmatprep.subr.mxu0 0.0
      %433 = vmatpush1.xpose.msra.mxu0 0.0
      %434 = vmatprep.subr.mxu0 0.0
      %435 = vmatpush1.xpose.msra.mxu0 0.0
      %436 = vmatprep.subr.mxu0 0.0
      %437 = vmatpush1.xpose.msra.mxu0 0.0
      %438 = vmatprep.subr.mxu0 0.0
      %439 = vmatpush1.xpose.msra.mxu0 0.0
      %440 = vmatprep.subr.mxu0 0.0
      %441 = vmatpush1.xpose.msra.mxu0 0.0
      %442 = vmatprep.subr.mxu0 0.0
      %443 = vmatpush1.xpose.msra.mxu0 %v418
      %444 = vmatprep.subr.mxu0 0.0
      %445 = vmatpush1.xpose.msra.mxu0 %v416
      %446 = vmatprep.subr.mxu0 0.0
      %447 = vmatpush1.xpose.msra.mxu0 %v414
      %448 = vmatprep.subr.mxu0 0.0
      %449 = vmatpush1.xpose.msra.mxu0 %v412
      %450 = vmatprep.subr.mxu0 0.0
      %451 = vmatpush1.xpose.msra.mxu0 %v410
      %452 = vmatprep.subr.mxu0 0.0
      %453 = vmatpush2.xpose.msra.mxu0 0.0
      %454 = vmatprep.subr.mxu0 0.0
      %455 = vmatpush2.xpose.msra.mxu0 0.0
      %456 = vmatprep.subr.mxu0 0.0
      %457 = vmatpush2.xpose.msra.mxu0 0.0
      %458 = vmatprep.subr.mxu0 0.0
      %459 = vmatpush2.xpose.msra.mxu0 0.0
      %460 = vmatprep.subr.mxu0 0.0
      %461 = vmatpush2.xpose.msra.mxu0 0.0
      %462 = vmatprep.subr.mxu0 0.0
      %463 = vmatpush2.xpose.msra.mxu0 0.0
      %464 = vmatprep.subr.mxu0 0.0
      %465 = vmatpush2.xpose.msra.mxu0 0.0
      %466 = vmatprep.subr.mxu0 0.0
      %467 = vmatpush2.xpose.msra.mxu0 0.0
      %468 = vmatprep.subr.mxu0 0.0
      %469 = vmatpush2.xpose.msra.mxu0 0.0
      %470 = vmatprep.subr.mxu0 0.0
      %471 = vmatpush2.xpose.msra.mxu0 0.0
      %472 = vmatprep.subr.mxu0 0.0
      %473 = vmatpush2.xpose.msra.mxu0 0.0
      %474 = vmatprep.subr.mxu0 0.0
      %475 = vmatpush2.xpose.msra.mxu0 0.0
      %476 = vmatprep.subr.mxu0 0.0
      %477 = vmatpush2.xpose.msra.mxu0 0.0
      %478 = vmatprep.subr.mxu0 0.0
      %479 = vmatpush2.xpose.msra.mxu0 0.0
      %480 = vmatprep.subr.mxu0 0.0
      %481 = vmatpush2.xpose.msra.mxu0 0.0
      %482 = vmatprep.subr.mxu0 0.0
      %483 = vmatpush2.xpose.msra.mxu0 0.0
      %484 = vmatprep.mubr.f32.mxu0 0.0
      %485 = vmatmul.mubr.f32.gmra.mxu0 %v400
      %v486 = vpop.f32.mrf.mxu0
      %v487 = vadd.f32 %v374, %v486
      %v488 = vpop.f32.mrf.mxu0
      %489 = vmatprep.mubr.f32.mxu0 0.0
      %490 = vmatmul.mubr.f32.gmra.mxu0 %v402
      %v491 = vpop.f32.mrf.mxu0
      %v492 = vadd.f32 %v375, %v491
      %v493 = vpop.f32.mrf.mxu0
      %494 = vmatprep.mubr.f32.mxu0 0.0
      %495 = vmatmul.mubr.f32.gmra.mxu0 %v404
      %v496 = vpop.f32.mrf.mxu0
      %v497 = vadd.f32 %v376, %v496
      %v498 = vpop.f32.mrf.mxu0
      %499 = vmatprep.mubr.f32.mxu0 0.0
      %500 = vmatmul.mubr.f32.gmra.mxu0 %v406
      %v501 = vpop.f32.mrf.mxu0
      %v502 = vadd.f32 %v377, %v501
      %v503 = vpop.f32.mrf.mxu0
      %504 = vmatprep.mubr.f32.mxu0 0.0
      %505 = vmatmul.mubr.f32.gmra.mxu0 %v408
      %v506 = vpop.f32.mrf.mxu0
      %v507 = vadd.f32 %v378, %v506
      %v508 = vpop.f32.mrf.mxu0
      %509 = vdwg.mxu0
      %vm510 = vcmask 326656
      %v511 = vsel %vm510, %v487, -inf
      %512 = vmax.xlane.f32.xlu0 %v511
      %v513 = vpop.xlane.xlu0 %512
      %v514 = vsel %vm510, %v492, -inf
      %515 = vmax.xlane.f32.xlu0 %v514
      %v516 = vpop.xlane.xlu0 %515
      %v517 = vsel %vm510, %v497, -inf
      %518 = vmax.xlane.f32.xlu0 %v517
      %v519 = vpop.xlane.xlu0 %518
      %v520 = vsel %vm510, %v502, -inf
      %521 = vmax.xlane.f32.xlu0 %v520
      %v522 = vpop.xlane.xlu0 %521
      %v523 = vsel %vm510, %v507, -inf
      %524 = vmax.xlane.f32.xlu0 %v523
      %v525 = vpop.xlane.xlu0 %524
      %v526 = vsub.f32 %v487, %v513
      %v527 = vsub.f32 %v492, %v516
      %v528 = vsub.f32 %v497, %v519
      %v529 = vsub.f32 %v502, %v522
      %v530 = vsub.f32 %v507, %v525
      %v531 = vmul.f32 %v526, 1.442695
      %v532 = vpow.pop %v531
      %v533 = vmul.f32 %v527, 1.442695
      %v534 = vpow.pop %v533
      %v535 = vmul.f32 %v528, 1.442695
      %v536 = vpow.pop %v535
      %v537 = vmul.f32 %v529, 1.442695
      %v538 = vpow.pop %v537
      %v539 = vmul.f32 %v530, 1.442695
      %v540 = vpow.pop %v539
      %v541 = vsel %vm510, %v532, 0.0
      %542 = vadd.xlane.f32.xlu0 %v541
      %v543 = vpop.xlane.xlu0 %542
      %v544 = vsel %vm510, %v534, 0.0
      %545 = vadd.xlane.f32.xlu0 %v544
      %v546 = vpop.xlane.xlu0 %545
      %v547 = vsel %vm510, %v536, 0.0
      %548 = vadd.xlane.f32.xlu0 %v547
      %v549 = vpop.xlane.xlu0 %548
      %v550 = vsel %vm510, %v538, 0.0
      %551 = vadd.xlane.f32.xlu0 %v550
      %v552 = vpop.xlane.xlu0 %551
      %v553 = vsel %vm510, %v540, 0.0
      %554 = vadd.xlane.f32.xlu0 %v553
      %v555 = vpop.xlane.xlu0 %554
      %v556 = vrcp.pop %v543
      %v557 = vrcp.pop %v546
      %v558 = vrcp.pop %v549
      %v559 = vrcp.pop %v552
      %v560 = vrcp.pop %v555
      %v561 = vmul.f32 %v532, %v556
      %v562 = vmul.f32 %v534, %v557
      %v563 = vmul.f32 %v536, %v558
      %v564 = vmul.f32 %v538, %v559
      %v565 = vmul.f32 %v540, %v560
      %566 = vrot.lane.b32.xlu0 %v351, 64
      %v567 = vpop.permute.xlu0 %566
      %568 = vrot.lane.b32.xlu0 %v356, 64
      %v569 = vpop.permute.xlu0 %568
      %570 = vrot.lane.b32.xlu0 %v361, 64
      %v571 = vpop.permute.xlu0 %570
      %572 = vrot.lane.b32.xlu0 %v366, 64
      %v573 = vpop.permute.xlu0 %572
      %574 = vrot.lane.b32.xlu0 %v371, 64
      %v575 = vpop.permute.xlu0 %574
      %v582 = vsel %vm510, %v561, 0
      %v585 = vsel %vm510, %v562, 0
      %v588 = vsel %vm510, %v563, 0
      %v591 = vsel %vm510, %v564, 0
      %v594 = vsel %vm510, %v565, 0
      %596 = vmatprep.subr.mxu0 0.0
      %597 = vmatpush1.msra.mxu0 0.0
      %598 = vmatprep.subr.mxu0 0.0
      %599 = vmatpush1.msra.mxu0 0.0
      %600 = vmatprep.subr.mxu0 0.0
      %601 = vmatpush1.msra.mxu0 0.0
      %602 = vmatprep.subr.mxu0 0.0
      %603 = vmatpush1.msra.mxu0 0.0
      %604 = vmatprep.subr.mxu0 0.0
      %605 = vmatpush1.msra.mxu0 0.0
      %606 = vmatprep.subr.mxu0 0.0
      %607 = vmatpush1.msra.mxu0 0.0
      %608 = vmatprep.subr.mxu0 0.0
      %609 = vmatpush1.msra.mxu0 0.0
      %610 = vmatprep.subr.mxu0 0.0
      %611 = vmatpush1.msra.mxu0 0.0
      %612 = vmatprep.subr.mxu0 0.0
      %613 = vmatpush1.msra.mxu0 0.0
      %614 = vmatprep.subr.mxu0 0.0
      %615 = vmatpush1.msra.mxu0 0.0
      %616 = vmatprep.subr.mxu0 0.0
      %617 = vmatpush1.msra.mxu0 0.0
      %618 = vmatprep.subr.mxu0 0.0
      %619 = vmatpush1.msra.mxu0 %v575
      %620 = vmatprep.subr.mxu0 0.0
      %621 = vmatpush1.msra.mxu0 %v573
      %622 = vmatprep.subr.mxu0 0.0
      %623 = vmatpush1.msra.mxu0 %v571
      %624 = vmatprep.subr.mxu0 0.0
      %625 = vmatpush1.msra.mxu0 %v569
      %626 = vmatprep.subr.mxu0 0.0
      %627 = vmatpush1.msra.mxu0 %v567
      %628 = vmatprep.subr.mxu0 0.0
      %629 = vmatpush2.msra.mxu0 0.0
      %630 = vmatprep.subr.mxu0 0.0
      %631 = vmatpush2.msra.mxu0 0.0
      %632 = vmatprep.subr.mxu0 0.0
      %633 = vmatpush2.msra.mxu0 0.0
      %634 = vmatprep.subr.mxu0 0.0
      %635 = vmatpush2.msra.mxu0 0.0
      %636 = vmatprep.subr.mxu0 0.0
      %637 = vmatpush2.msra.mxu0 0.0
      %638 = vmatprep.subr.mxu0 0.0
      %639 = vmatpush2.msra.mxu0 0.0
      %640 = vmatprep.subr.mxu0 0.0
      %641 = vmatpush2.msra.mxu0 0.0
      %642 = vmatprep.subr.mxu0 0.0
      %643 = vmatpush2.msra.mxu0 0.0
      %644 = vmatprep.subr.mxu0 0.0
      %645 = vmatpush2.msra.mxu0 0.0
      %646 = vmatprep.subr.mxu0 0.0
      %647 = vmatpush2.msra.mxu0 0.0
      %648 = vmatprep.subr.mxu0 0.0
      %649 = vmatpush2.msra.mxu0 0.0
      %650 = vmatprep.subr.mxu0 0.0
      %651 = vmatpush2.msra.mxu0 0.0
      %652 = vmatprep.subr.mxu0 0.0
      %653 = vmatpush2.msra.mxu0 0.0
      %654 = vmatprep.subr.mxu0 0.0
      %655 = vmatpush2.msra.mxu0 0.0
      %656 = vmatprep.subr.mxu0 0.0
      %657 = vmatpush2.msra.mxu0 0.0
      %658 = vmatprep.subr.mxu0 0.0
      %659 = vmatpush2.msra.mxu0 0.0
      %660 = vmatprep.mubr.f32.mxu0 0.0
      %661 = vmatmul.mubr.f32.gmra.mxu0 %v582
      %v662 = vpop.f32.mrf.mxu0
      %v663 = vadd.f32 0.0, %v662
      %v664 = vpop.f32.mrf.mxu0
      %665 = vmatprep.mubr.f32.mxu0 0.0
      %666 = vmatmul.mubr.f32.gmra.mxu0 %v585
      %v667 = vpop.f32.mrf.mxu0
      %v668 = vadd.f32 0.0, %v667
      %v669 = vpop.f32.mrf.mxu0
      %670 = vmatprep.mubr.f32.mxu0 0.0
      %671 = vmatmul.mubr.f32.gmra.mxu0 %v588
      %v672 = vpop.f32.mrf.mxu0
      %v673 = vadd.f32 0.0, %v672
      %v674 = vpop.f32.mrf.mxu0
      %675 = vmatprep.mubr.f32.mxu0 0.0
      %676 = vmatmul.mubr.f32.gmra.mxu0 %v591
      %v677 = vpop.f32.mrf.mxu0
      %v678 = vadd.f32 0.0, %v677
      %v679 = vpop.f32.mrf.mxu0
      %680 = vmatprep.mubr.f32.mxu0 0.0
      %681 = vmatmul.mubr.f32.gmra.mxu0 %v594
      %v682 = vpop.f32.mrf.mxu0
      %v683 = vadd.f32 0.0, %v682
      %v684 = vpop.f32.mrf.mxu0
      %685 = vdwg.mxu0
      %686 = vrot.lane.b32.xlu0 %v351, 120
      %v687 = vpop.permute.xlu0 %686
      %688 = vrot.lane.b32.xlu0 %v356, 120
      %v689 = vpop.permute.xlu0 %688
      %690 = vrot.lane.b32.xlu0 %v361, 120
      %v691 = vpop.permute.xlu0 %690
      %692 = vrot.lane.b32.xlu0 %v366, 120
      %v693 = vpop.permute.xlu0 %692
      %694 = vrot.lane.b32.xlu0 %v371, 120
      %v695 = vpop.permute.xlu0 %694
      %696 = vrot.lane.b32.xlu0 %v351, 88
      %v697 = vpop.permute.xlu0 %696
      %698 = vrot.lane.b32.xlu0 %v356, 88
      %v699 = vpop.permute.xlu0 %698
      %700 = vrot.lane.b32.xlu0 %v361, 88
      %v701 = vpop.permute.xlu0 %700
      %702 = vrot.lane.b32.xlu0 %v366, 88
      %v703 = vpop.permute.xlu0 %702
      %704 = vrot.lane.b32.xlu0 %v371, 88
      %v705 = vpop.permute.xlu0 %704
      %v706 = vsel %vm399, %v687, 0
      %v708 = vsel %vm399, %v689, 0
      %v710 = vsel %vm399, %v691, 0
      %v712 = vsel %vm399, %v693, 0
      %v714 = vsel %vm399, %v695, 0
      %v716 = vsel %vm399, %v697, 0
      %v718 = vsel %vm399, %v699, 0
      %v720 = vsel %vm399, %v701, 0
      %v722 = vsel %vm399, %v703, 0
      %v724 = vsel %vm399, %v705, 0
      %726 = vmatprep.subr.mxu0 0.0
      %727 = vmatpush1.xpose.msra.mxu0 0.0
      %728 = vmatprep.subr.mxu0 0.0
      %729 = vmatpush1.xpose.msra.mxu0 0.0
      %730 = vmatprep.subr.mxu0 0.0
      %731 = vmatpush1.xpose.msra.mxu0 0.0
      %732 = vmatprep.subr.mxu0 0.0
      %733 = vmatpush1.xpose.msra.mxu0 0.0
      %734 = vmatprep.subr.mxu0 0.0
      %735 = vmatpush1.xpose.msra.mxu0 0.0
      %736 = vmatprep.subr.mxu0 0.0
      %737 = vmatpush1.xpose.msra.mxu0 0.0
      %738 = vmatprep.subr.mxu0 0.0
      %739 = vmatpush1.xpose.msra.mxu0 0.0
      %740 = vmatprep.subr.mxu0 0.0
      %741 = vmatpush1.xpose.msra.mxu0 0.0
      %742 = vmatprep.subr.mxu0 0.0
      %743 = vmatpush1.xpose.msra.mxu0 0.0
      %744 = vmatprep.subr.mxu0 0.0
      %745 = vmatpush1.xpose.msra.mxu0 0.0
      %746 = vmatprep.subr.mxu0 0.0
      %747 = vmatpush1.xpose.msra.mxu0 0.0
      %748 = vmatprep.subr.mxu0 0.0
      %749 = vmatpush1.xpose.msra.mxu0 %v724
      %750 = vmatprep.subr.mxu0 0.0
      %751 = vmatpush1.xpose.msra.mxu0 %v722
      %752 = vmatprep.subr.mxu0 0.0
      %753 = vmatpush1.xpose.msra.mxu0 %v720
      %754 = vmatprep.subr.mxu0 0.0
      %755 = vmatpush1.xpose.msra.mxu0 %v718
      %756 = vmatprep.subr.mxu0 0.0
      %757 = vmatpush1.xpose.msra.mxu0 %v716
      %758 = vmatprep.subr.mxu0 0.0
      %759 = vmatpush2.xpose.msra.mxu0 0.0
      %760 = vmatprep.subr.mxu0 0.0
      %761 = vmatpush2.xpose.msra.mxu0 0.0
      %762 = vmatprep.subr.mxu0 0.0
      %763 = vmatpush2.xpose.msra.mxu0 0.0
      %764 = vmatprep.subr.mxu0 0.0
      %765 = vmatpush2.xpose.msra.mxu0 0.0
      %766 = vmatprep.subr.mxu0 0.0
      %767 = vmatpush2.xpose.msra.mxu0 0.0
      %768 = vmatprep.subr.mxu0 0.0
      %769 = vmatpush2.xpose.msra.mxu0 0.0
      %770 = vmatprep.subr.mxu0 0.0
      %771 = vmatpush2.xpose.msra.mxu0 0.0
      %772 = vmatprep.subr.mxu0 0.0
      %773 = vmatpush2.xpose.msra.mxu0 0.0
      %774 = vmatprep.subr.mxu0 0.0
      %775 = vmatpush2.xpose.msra.mxu0 0.0
      %776 = vmatprep.subr.mxu0 0.0
      %777 = vmatpush2.xpose.msra.mxu0 0.0
      %778 = vmatprep.subr.mxu0 0.0
      %779 = vmatpush2.xpose.msra.mxu0 0.0
      %780 = vmatprep.subr.mxu0 0.0
      %781 = vmatpush2.xpose.msra.mxu0 0.0
      %782 = vmatprep.subr.mxu0 0.0
      %783 = vmatpush2.xpose.msra.mxu0 0.0
      %784 = vmatprep.subr.mxu0 0.0
      %785 = vmatpush2.xpose.msra.mxu0 0.0
      %786 = vmatprep.subr.mxu0 0.0
      %787 = vmatpush2.xpose.msra.mxu0 0.0
      %788 = vmatprep.subr.mxu0 0.0
      %789 = vmatpush2.xpose.msra.mxu0 0.0
      %790 = vmatprep.mubr.f32.mxu0 0.0
      %791 = vmatmul.mubr.f32.gmra.mxu0 %v706
      %v792 = vpop.f32.mrf.mxu0
      %v793 = vadd.f32 %v374, %v792
      %v794 = vpop.f32.mrf.mxu0
      %795 = vmatprep.mubr.f32.mxu0 0.0
      %796 = vmatmul.mubr.f32.gmra.mxu0 %v708
      %v797 = vpop.f32.mrf.mxu0
      %v798 = vadd.f32 %v375, %v797
      %v799 = vpop.f32.mrf.mxu0
      %800 = vmatprep.mubr.f32.mxu0 0.0
      %801 = vmatmul.mubr.f32.gmra.mxu0 %v710
      %v802 = vpop.f32.mrf.mxu0
      %v803 = vadd.f32 %v376, %v802
      %v804 = vpop.f32.mrf.mxu0
      %805 = vmatprep.mubr.f32.mxu0 0.0
      %806 = vmatmul.mubr.f32.gmra.mxu0 %v712
      %v807 = vpop.f32.mrf.mxu0
      %v808 = vadd.f32 %v377, %v807
      %v809 = vpop.f32.mrf.mxu0
      %810 = vmatprep.mubr.f32.mxu0 0.0
      %811 = vmatmul.mubr.f32.gmra.mxu0 %v714
      %v812 = vpop.f32.mrf.mxu0
      %v813 = vadd.f32 %v378, %v812
      %v814 = vpop.f32.mrf.mxu0
      %815 = vdwg.mxu0
      %v816 = vsel %vm510, %v793, -inf
      %817 = vmax.xlane.f32.xlu0 %v816
      %v818 = vpop.xlane.xlu0 %817
      %v819 = vsel %vm510, %v798, -inf
      %820 = vmax.xlane.f32.xlu0 %v819
      %v821 = vpop.xlane.xlu0 %820
      %v822 = vsel %vm510, %v803, -inf
      %823 = vmax.xlane.f32.xlu0 %v822
      %v824 = vpop.xlane.xlu0 %823
      %v825 = vsel %vm510, %v808, -inf
      %826 = vmax.xlane.f32.xlu0 %v825
      %v827 = vpop.xlane.xlu0 %826
      %v828 = vsel %vm510, %v813, -inf
      %829 = vmax.xlane.f32.xlu0 %v828
      %v830 = vpop.xlane.xlu0 %829
      %v831 = vsub.f32 %v793, %v818
      %v832 = vsub.f32 %v798, %v821
      %v833 = vsub.f32 %v803, %v824
      %v834 = vsub.f32 %v808, %v827
      %v835 = vsub.f32 %v813, %v830
      %v836 = vmul.f32 %v831, 1.442695
      %v837 = vpow.pop %v836
      %v838 = vmul.f32 %v832, 1.442695
      %v839 = vpow.pop %v838
      %v840 = vmul.f32 %v833, 1.442695
      %v841 = vpow.pop %v840
      %v842 = vmul.f32 %v834, 1.442695
      %v843 = vpow.pop %v842
      %v844 = vmul.f32 %v835, 1.442695
      %v845 = vpow.pop %v844
      %v846 = vsel %vm510, %v837, 0.0
      %847 = vadd.xlane.f32.xlu0 %v846
      %v848 = vpop.xlane.xlu0 %847
      %v849 = vsel %vm510, %v839, 0.0
      %850 = vadd.xlane.f32.xlu0 %v849
      %v851 = vpop.xlane.xlu0 %850
      %v852 = vsel %vm510, %v841, 0.0
      %853 = vadd.xlane.f32.xlu0 %v852
      %v854 = vpop.xlane.xlu0 %853
      %v855 = vsel %vm510, %v843, 0.0
      %856 = vadd.xlane.f32.xlu0 %v855
      %v857 = vpop.xlane.xlu0 %856
      %v858 = vsel %vm510, %v845, 0.0
      %859 = vadd.xlane.f32.xlu0 %v858
      %v860 = vpop.xlane.xlu0 %859
      %v861 = vrcp.pop %v848
      %v862 = vrcp.pop %v851
      %v863 = vrcp.pop %v854
      %v864 = vrcp.pop %v857
      %v865 = vrcp.pop %v860
      %v866 = vmul.f32 %v837, %v861
      %v867 = vmul.f32 %v839, %v862
      %v868 = vmul.f32 %v841, %v863
      %v869 = vmul.f32 %v843, %v864
      %v870 = vmul.f32 %v845, %v865
      %871 = vrot.lane.b32.xlu0 %v351, 56
      %v872 = vpop.permute.xlu0 %871
      %873 = vrot.lane.b32.xlu0 %v356, 56
      %v874 = vpop.permute.xlu0 %873
      %875 = vrot.lane.b32.xlu0 %v361, 56
      %v876 = vpop.permute.xlu0 %875
      %877 = vrot.lane.b32.xlu0 %v366, 56
      %v878 = vpop.permute.xlu0 %877
      %879 = vrot.lane.b32.xlu0 %v371, 56
      %v880 = vpop.permute.xlu0 %879
      %v887 = vsel %vm510, %v866, 0
      %v890 = vsel %vm510, %v867, 0
      %v893 = vsel %vm510, %v868, 0
      %v896 = vsel %vm510, %v869, 0
      %v899 = vsel %vm510, %v870, 0
      %901 = vmatprep.subr.mxu0 0.0
      %902 = vmatpush1.msra.mxu0 0.0
      %903 = vmatprep.subr.mxu0 0.0
      %904 = vmatpush1.msra.mxu0 0.0
      %905 = vmatprep.subr.mxu0 0.0
      %906 = vmatpush1.msra.mxu0 0.0
      %907 = vmatprep.subr.mxu0 0.0
      %908 = vmatpush1.msra.mxu0 0.0
      %909 = vmatprep.subr.mxu0 0.0
      %910 = vmatpush1.msra.mxu0 0.0
      %911 = vmatprep.subr.mxu0 0.0
      %912 = vmatpush1.msra.mxu0 0.0
      %913 = vmatprep.subr.mxu0 0.0
      %914 = vmatpush1.msra.mxu0 0.0
      %915 = vmatprep.subr.mxu0 0.0
      %916 = vmatpush1.msra.mxu0 0.0
      %917 = vmatprep.subr.mxu0 0.0
      %918 = vmatpush1.msra.mxu0 0.0
      %919 = vmatprep.subr.mxu0 0.0
      %920 = vmatpush1.msra.mxu0 0.0
      %921 = vmatprep.subr.mxu0 0.0
      %922 = vmatpush1.msra.mxu0 0.0
      %923 = vmatprep.subr.mxu0 0.0
      %924 = vmatpush1.msra.mxu0 %v880
      %925 = vmatprep.subr.mxu0 0.0
      %926 = vmatpush1.msra.mxu0 %v878
      %927 = vmatprep.subr.mxu0 0.0
      %928 = vmatpush1.msra.mxu0 %v876
      %929 = vmatprep.subr.mxu0 0.0
      %930 = vmatpush1.msra.mxu0 %v874
      %931 = vmatprep.subr.mxu0 0.0
      %932 = vmatpush1.msra.mxu0 %v872
      %933 = vmatprep.subr.mxu0 0.0
      %934 = vmatpush2.msra.mxu0 0.0
      %935 = vmatprep.subr.mxu0 0.0
      %936 = vmatpush2.msra.mxu0 0.0
      %937 = vmatprep.subr.mxu0 0.0
      %938 = vmatpush2.msra.mxu0 0.0
      %939 = vmatprep.subr.mxu0 0.0
      %940 = vmatpush2.msra.mxu0 0.0
      %941 = vmatprep.subr.mxu0 0.0
      %942 = vmatpush2.msra.mxu0 0.0
      %943 = vmatprep.subr.mxu0 0.0
      %944 = vmatpush2.msra.mxu0 0.0
      %945 = vmatprep.subr.mxu0 0.0
      %946 = vmatpush2.msra.mxu0 0.0
      %947 = vmatprep.subr.mxu0 0.0
      %948 = vmatpush2.msra.mxu0 0.0
      %949 = vmatprep.subr.mxu0 0.0
      %950 = vmatpush2.msra.mxu0 0.0
      %951 = vmatprep.subr.mxu0 0.0
      %952 = vmatpush2.msra.mxu0 0.0
      %953 = vmatprep.subr.mxu0 0.0
      %954 = vmatpush2.msra.mxu0 0.0
      %955 = vmatprep.subr.mxu0 0.0
      %956 = vmatpush2.msra.mxu0 0.0
      %957 = vmatprep.subr.mxu0 0.0
      %958 = vmatpush2.msra.mxu0 0.0
      %959 = vmatprep.subr.mxu0 0.0
      %960 = vmatpush2.msra.mxu0 0.0
      %961 = vmatprep.subr.mxu0 0.0
      %962 = vmatpush2.msra.mxu0 0.0
      %963 = vmatprep.subr.mxu0 0.0
      %964 = vmatpush2.msra.mxu0 0.0
      %965 = vmatprep.mubr.f32.mxu0 0.0
      %966 = vmatmul.mubr.f32.gmra.mxu0 %v887
      %v967 = vpop.f32.mrf.mxu0
      %v968 = vadd.f32 0.0, %v967
      %v969 = vpop.f32.mrf.mxu0
      %970 = vmatprep.mubr.f32.mxu0 0.0
      %971 = vmatmul.mubr.f32.gmra.mxu0 %v890
      %v972 = vpop.f32.mrf.mxu0
      %v973 = vadd.f32 0.0, %v972
      %v974 = vpop.f32.mrf.mxu0
      %975 = vmatprep.mubr.f32.mxu0 0.0
      %976 = vmatmul.mubr.f32.gmra.mxu0 %v893
      %v977 = vpop.f32.mrf.mxu0
      %v978 = vadd.f32 0.0, %v977
      %v979 = vpop.f32.mrf.mxu0
      %980 = vmatprep.mubr.f32.mxu0 0.0
      %981 = vmatmul.mubr.f32.gmra.mxu0 %v896
      %v982 = vpop.f32.mrf.mxu0
      %v983 = vadd.f32 0.0, %v982
      %v984 = vpop.f32.mrf.mxu0
      %985 = vmatprep.mubr.f32.mxu0 0.0
      %986 = vmatmul.mubr.f32.gmra.mxu0 %v899
      %v987 = vpop.f32.mrf.mxu0
      %v988 = vadd.f32 0.0, %v987
      %v989 = vpop.f32.mrf.mxu0
      %990 = vdwg.mxu0
      %v992 = vsel %vm399, %v968, 0
      %v995 = vsel %vm399, %v973, 0
      %v998 = vsel %vm399, %v978, 0
      %v1001 = vsel %vm399, %v983, 0
      %v1004 = vsel %vm399, %v988, 0
      %1006 = vmatprep.subr.mxu0 0.0
      %1007 = vmatpush1.msra.mxu0 0.0
      %1008 = vmatprep.subr.mxu0 0.0
      %1009 = vmatpush1.msra.mxu0 0.0
      %1010 = vmatprep.subr.mxu0 0.0
      %1011 = vmatpush1.msra.mxu0 0.0
      %1012 = vmatprep.subr.mxu0 0.0
      %1013 = vmatpush1.msra.mxu0 0.0
      %1014 = vmatprep.subr.mxu0 0.0
      %1015 = vmatpush1.msra.mxu0 0.0
      %1016 = vmatprep.subr.mxu0 0.0
      %1017 = vmatpush1.msra.mxu0 0.0
      %1018 = vmatprep.subr.mxu0 0.0
      %1019 = vmatpush1.msra.mxu0 0.0
      %1020 = vmatprep.subr.mxu0 0.0
      %1021 = vmatpush1.msra.mxu0 0.0
      %1022 = vmatprep.subr.mxu0 0.0
      %1023 = vmatpush1.msra.mxu0 0.0
      %1024 = vmatprep.subr.mxu0 0.0
      %1025 = vmatpush1.msra.mxu0 0.0
      %1026 = vmatprep.subr.mxu0 0.0
      %1027 = vmatpush1.msra.mxu0 0.0
      %1028 = vmatprep.subr.mxu0 0.0
      %1029 = vmatpush1.msra.mxu0 0.0
      %1030 = vmatprep.subr.mxu0 0.0
      %1031 = vmatpush1.msra.mxu0 0.0
      %1032 = vmatprep.subr.mxu0 0.0
      %1033 = vmatpush1.msra.mxu0 0.0
      %1034 = vmatprep.subr.mxu0 0.0
      %1035 = vmatpush1.msra.mxu0 0.0
      %1036 = vmatprep.subr.mxu0 0.0
      %1037 = vmatpush1.msra.mxu0 %v380
      %1038 = vmatprep.subr.mxu0 0.0
      %1039 = vmatpush2.msra.mxu0 0.0
      %1040 = vmatprep.subr.mxu0 0.0
      %1041 = vmatpush2.msra.mxu0 0.0
      %1042 = vmatprep.subr.mxu0 0.0
      %1043 = vmatpush2.msra.mxu0 0.0
      %1044 = vmatprep.subr.mxu0 0.0
      %1045 = vmatpush2.msra.mxu0 0.0
      %1046 = vmatprep.subr.mxu0 0.0
      %1047 = vmatpush2.msra.mxu0 0.0
      %1048 = vmatprep.subr.mxu0 0.0
      %1049 = vmatpush2.msra.mxu0 0.0
      %1050 = vmatprep.subr.mxu0 0.0
      %1051 = vmatpush2.msra.mxu0 0.0
      %1052 = vmatprep.subr.mxu0 0.0
      %1053 = vmatpush2.msra.mxu0 0.0
      %1054 = vmatprep.subr.mxu0 0.0
      %1055 = vmatpush2.msra.mxu0 0.0
      %1056 = vmatprep.subr.mxu0 0.0
      %1057 = vmatpush2.msra.mxu0 0.0
      %1058 = vmatprep.subr.mxu0 0.0
      %1059 = vmatpush2.msra.mxu0 0.0
      %1060 = vmatprep.subr.mxu0 0.0
      %1061 = vmatpush2.msra.mxu0 0.0
      %1062 = vmatprep.subr.mxu0 0.0
      %1063 = vmatpush2.msra.mxu0 0.0
      %1064 = vmatprep.subr.mxu0 0.0
      %1065 = vmatpush2.msra.mxu0 0.0
      %1066 = vmatprep.subr.mxu0 0.0
      %1067 = vmatpush2.msra.mxu0 0.0
      %1068 = vmatprep.subr.mxu0 0.0
      %1069 = vmatpush2.msra.mxu0 0.0
      %1070 = vmatprep.mubr.f32.mxu0 0.0
      %1071 = vmatmul.mubr.f32.gmra.mxu0 %v992
      %v1072 = vpop.f32.mrf.mxu0
      %v1073 = vadd.f32 0.0, %v1072
      %v1074 = vpop.f32.mrf.mxu0
      %1075 = vmatprep.mubr.f32.mxu0 0.0
      %1076 = vmatmul.mubr.f32.gmra.mxu0 %v995
      %v1077 = vpop.f32.mrf.mxu0
      %v1078 = vadd.f32 0.0, %v1077
      %v1079 = vpop.f32.mrf.mxu0
      %1080 = vmatprep.mubr.f32.mxu0 0.0
      %1081 = vmatmul.mubr.f32.gmra.mxu0 %v998
      %v1082 = vpop.f32.mrf.mxu0
      %v1083 = vadd.f32 0.0, %v1082
      %v1084 = vpop.f32.mrf.mxu0
      %1085 = vmatprep.mubr.f32.mxu0 0.0
      %1086 = vmatmul.mubr.f32.gmra.mxu0 %v1001
      %v1087 = vpop.f32.mrf.mxu0
      %v1088 = vadd.f32 0.0, %v1087
      %v1089 = vpop.f32.mrf.mxu0
      %1090 = vmatprep.mubr.f32.mxu0 0.0
      %1091 = vmatmul.mubr.f32.gmra.mxu0 %v1004
      %v1092 = vpop.f32.mrf.mxu0
      %v1093 = vadd.f32 0.0, %v1092
      %v1094 = vpop.f32.mrf.mxu0
      %1095 = vdwg.mxu0
      %v1097 = vsel %vm399, %v663, 0
      %v1100 = vsel %vm399, %v668, 0
      %v1103 = vsel %vm399, %v673, 0
      %v1106 = vsel %vm399, %v678, 0
      %v1109 = vsel %vm399, %v683, 0
      %1111 = vmatprep.subr.mxu0 0.0
      %1112 = vmatpush1.msra.mxu0 0.0
      %1113 = vmatprep.subr.mxu0 0.0
      %1114 = vmatpush1.msra.mxu0 0.0
      %1115 = vmatprep.subr.mxu0 0.0
      %1116 = vmatpush1.msra.mxu0 0.0
      %1117 = vmatprep.subr.mxu0 0.0
      %1118 = vmatpush1.msra.mxu0 0.0
      %1119 = vmatprep.subr.mxu0 0.0
      %1120 = vmatpush1.msra.mxu0 0.0
      %1121 = vmatprep.subr.mxu0 0.0
      %1122 = vmatpush1.msra.mxu0 0.0
      %1123 = vmatprep.subr.mxu0 0.0
      %1124 = vmatpush1.msra.mxu0 0.0
      %1125 = vmatprep.subr.mxu0 0.0
      %1126 = vmatpush1.msra.mxu0 0.0
      %1127 = vmatprep.subr.mxu0 0.0
      %1128 = vmatpush1.msra.mxu0 0.0
      %1129 = vmatprep.subr.mxu0 0.0
      %1130 = vmatpush1.msra.mxu0 0.0
      %1131 = vmatprep.subr.mxu0 0.0
      %1132 = vmatpush1.msra.mxu0 0.0
      %1133 = vmatprep.subr.mxu0 0.0
      %1134 = vmatpush1.msra.mxu0 0.0
      %1135 = vmatprep.subr.mxu0 0.0
      %1136 = vmatpush1.msra.mxu0 0.0
      %1137 = vmatprep.subr.mxu0 0.0
      %1138 = vmatpush1.msra.mxu0 0.0
      %1139 = vmatprep.subr.mxu0 0.0
      %1140 = vmatpush1.msra.mxu0 0.0
      %1141 = vmatprep.subr.mxu0 0.0
      %1142 = vmatpush1.msra.mxu0 %v379
      %1143 = vmatprep.subr.mxu0 0.0
      %1144 = vmatpush2.msra.mxu0 0.0
      %1145 = vmatprep.subr.mxu0 0.0
      %1146 = vmatpush2.msra.mxu0 0.0
      %1147 = vmatprep.subr.mxu0 0.0
      %1148 = vmatpush2.msra.mxu0 0.0
      %1149 = vmatprep.subr.mxu0 0.0
      %1150 = vmatpush2.msra.mxu0 0.0
      %1151 = vmatprep.subr.mxu0 0.0
      %1152 = vmatpush2.msra.mxu0 0.0
      %1153 = vmatprep.subr.mxu0 0.0
      %1154 = vmatpush2.msra.mxu0 0.0
      %1155 = vmatprep.subr.mxu0 0.0
      %1156 = vmatpush2.msra.mxu0 0.0
      %1157 = vmatprep.subr.mxu0 0.0
      %1158 = vmatpush2.msra.mxu0 0.0
      %1159 = vmatprep.subr.mxu0 0.0
      %1160 = vmatpush2.msra.mxu0 0.0
      %1161 = vmatprep.subr.mxu0 0.0
      %1162 = vmatpush2.msra.mxu0 0.0
      %1163 = vmatprep.subr.mxu0 0.0
      %1164 = vmatpush2.msra.mxu0 0.0
      %1165 = vmatprep.subr.mxu0 0.0
      %1166 = vmatpush2.msra.mxu0 0.0
      %1167 = vmatprep.subr.mxu0 0.0
      %1168 = vmatpush2.msra.mxu0 0.0
      %1169 = vmatprep.subr.mxu0 0.0
      %1170 = vmatpush2.msra.mxu0 0.0
      %1171 = vmatprep.subr.mxu0 0.0
      %1172 = vmatpush2.msra.mxu0 0.0
      %1173 = vmatprep.subr.mxu0 0.0
      %1174 = vmatpush2.msra.mxu0 0.0
      %1175 = vmatprep.mubr.f32.mxu0 0.0
      %1176 = vmatmul.mubr.f32.gmra.mxu0 %v1097
      %v1177 = vpop.f32.mrf.mxu0
      %v1178 = vadd.f32 %v1073, %v1177
      %v1179 = vpop.f32.mrf.mxu0
      %1180 = vmatprep.mubr.f32.mxu0 0.0
      %1181 = vmatmul.mubr.f32.gmra.mxu0 %v1100
      %v1182 = vpop.f32.mrf.mxu0
      %v1183 = vadd.f32 %v1078, %v1182
      %v1184 = vpop.f32.mrf.mxu0
      %1185 = vmatprep.mubr.f32.mxu0 0.0
      %1186 = vmatmul.mubr.f32.gmra.mxu0 %v1103
      %v1187 = vpop.f32.mrf.mxu0
      %v1188 = vadd.f32 %v1083, %v1187
      %v1189 = vpop.f32.mrf.mxu0
      %1190 = vmatprep.mubr.f32.mxu0 0.0
      %1191 = vmatmul.mubr.f32.gmra.mxu0 %v1106
      %v1192 = vpop.f32.mrf.mxu0
      %v1193 = vadd.f32 %v1088, %v1192
      %v1194 = vpop.f32.mrf.mxu0
      %1195 = vmatprep.mubr.f32.mxu0 0.0
      %1196 = vmatmul.mubr.f32.gmra.mxu0 %v1109
      %v1197 = vpop.f32.mrf.mxu0
      %v1198 = vadd.f32 %v1093, %v1197
      %v1199 = vpop.f32.mrf.mxu0
      %1200 = vdwg.mxu0
      %1201 = vrot.lane.b32.xlu0 %v351, 112
      %v1202 = vpop.permute.xlu0 %1201
      %1203 = vrot.lane.b32.xlu0 %v356, 112
      %v1204 = vpop.permute.xlu0 %1203
      %1205 = vrot.lane.b32.xlu0 %v361, 112
      %v1206 = vpop.permute.xlu0 %1205
      %1207 = vrot.lane.b32.xlu0 %v366, 112
      %v1208 = vpop.permute.xlu0 %1207
      %1209 = vrot.lane.b32.xlu0 %v371, 112
      %v1210 = vpop.permute.xlu0 %1209
      %1211 = vrot.lane.b32.xlu0 %v351, 80
      %v1212 = vpop.permute.xlu0 %1211
      %1213 = vrot.lane.b32.xlu0 %v356, 80
      %v1214 = vpop.permute.xlu0 %1213
      %1215 = vrot.lane.b32.xlu0 %v361, 80
      %v1216 = vpop.permute.xlu0 %1215
      %1217 = vrot.lane.b32.xlu0 %v366, 80
      %v1218 = vpop.permute.xlu0 %1217
      %1219 = vrot.lane.b32.xlu0 %v371, 80
      %v1220 = vpop.permute.xlu0 %1219
      %v1221 = vsel %vm399, %v1202, 0
      %v1223 = vsel %vm399, %v1204, 0
      %v1225 = vsel %vm399, %v1206, 0
      %v1227 = vsel %vm399, %v1208, 0
      %v1229 = vsel %vm399, %v1210, 0
      %v1231 = vsel %vm399, %v1212, 0
      %v1233 = vsel %vm399, %v1214, 0
      %v1235 = vsel %vm399, %v1216, 0
      %v1237 = vsel %vm399, %v1218, 0
      %v1239 = vsel %vm399, %v1220, 0
      %1241 = vmatprep.subr.mxu0 0.0
      %1242 = vmatpush1.xpose.msra.mxu0 0.0
      %1243 = vmatprep.subr.mxu0 0.0
      %1244 = vmatpush1.xpose.msra.mxu0 0.0
      %1245 = vmatprep.subr.mxu0 0.0
      %1246 = vmatpush1.xpose.msra.mxu0 0.0
      %1247 = vmatprep.subr.mxu0 0.0
      %1248 = vmatpush1.xpose.msra.mxu0 0.0
      %1249 = vmatprep.subr.mxu0 0.0
      %1250 = vmatpush1.xpose.msra.mxu0 0.0
      %1251 = vmatprep.subr.mxu0 0.0
      %1252 = vmatpush1.xpose.msra.mxu0 0.0
      %1253 = vmatprep.subr.mxu0 0.0
      %1254 = vmatpush1.xpose.msra.mxu0 0.0
      %1255 = vmatprep.subr.mxu0 0.0
      %1256 = vmatpush1.xpose.msra.mxu0 0.0
      %1257 = vmatprep.subr.mxu0 0.0
      %1258 = vmatpush1.xpose.msra.mxu0 0.0
      %1259 = vmatprep.subr.mxu0 0.0
      %1260 = vmatpush1.xpose.msra.mxu0 0.0
      %1261 = vmatprep.subr.mxu0 0.0
      %1262 = vmatpush1.xpose.msra.mxu0 0.0
      %1263 = vmatprep.subr.mxu0 0.0
      %1264 = vmatpush1.xpose.msra.mxu0 %v1239
      %1265 = vmatprep.subr.mxu0 0.0
      %1266 = vmatpush1.xpose.msra.mxu0 %v1237
      %1267 = vmatprep.subr.mxu0 0.0
      %1268 = vmatpush1.xpose.msra.mxu0 %v1235
      %1269 = vmatprep.subr.mxu0 0.0
      %1270 = vmatpush1.xpose.msra.mxu0 %v1233
      %1271 = vmatprep.subr.mxu0 0.0
      %1272 = vmatpush1.xpose.msra.mxu0 %v1231
      %1273 = vmatprep.subr.mxu0 0.0
      %1274 = vmatpush2.xpose.msra.mxu0 0.0
      %1275 = vmatprep.subr.mxu0 0.0
      %1276 = vmatpush2.xpose.msra.mxu0 0.0
      %1277 = vmatprep.subr.mxu0 0.0
      %1278 = vmatpush2.xpose.msra.mxu0 0.0
      %1279 = vmatprep.subr.mxu0 0.0
      %1280 = vmatpush2.xpose.msra.mxu0 0.0
      %1281 = vmatprep.subr.mxu0 0.0
      %1282 = vmatpush2.xpose.msra.mxu0 0.0
      %1283 = vmatprep.subr.mxu0 0.0
      %1284 = vmatpush2.xpose.msra.mxu0 0.0
      %1285 = vmatprep.subr.mxu0 0.0
      %1286 = vmatpush2.xpose.msra.mxu0 0.0
      %1287 = vmatprep.subr.mxu0 0.0
      %1288 = vmatpush2.xpose.msra.mxu0 0.0
      %1289 = vmatprep.subr.mxu0 0.0
      %1290 = vmatpush2.xpose.msra.mxu0 0.0
      %1291 = vmatprep.subr.mxu0 0.0
      %1292 = vmatpush2.xpose.msra.mxu0 0.0
      %1293 = vmatprep.subr.mxu0 0.0
      %1294 = vmatpush2.xpose.msra.mxu0 0.0
      %1295 = vmatprep.subr.mxu0 0.0
      %1296 = vmatpush2.xpose.msra.mxu0 0.0
      %1297 = vmatprep.subr.mxu0 0.0
      %1298 = vmatpush2.xpose.msra.mxu0 0.0
      %1299 = vmatprep.subr.mxu0 0.0
      %1300 = vmatpush2.xpose.msra.mxu0 0.0
      %1301 = vmatprep.subr.mxu0 0.0
      %1302 = vmatpush2.xpose.msra.mxu0 0.0
      %1303 = vmatprep.subr.mxu0 0.0
      %1304 = vmatpush2.xpose.msra.mxu0 0.0
      %1305 = vmatprep.mubr.f32.mxu0 0.0
      %1306 = vmatmul.mubr.f32.gmra.mxu0 %v1221
      %v1307 = vpop.f32.mrf.mxu0
      %v1308 = vadd.f32 %v374, %v1307
      %v1309 = vpop.f32.mrf.mxu0
      %1310 = vmatprep.mubr.f32.mxu0 0.0
      %1311 = vmatmul.mubr.f32.gmra.mxu0 %v1223
      %v1312 = vpop.f32.mrf.mxu0
      %v1313 = vadd.f32 %v375, %v1312
      %v1314 = vpop.f32.mrf.mxu0
      %1315 = vmatprep.mubr.f32.mxu0 0.0
      %1316 = vmatmul.mubr.f32.gmra.mxu0 %v1225
      %v1317 = vpop.f32.mrf.mxu0
      %v1318 = vadd.f32 %v376, %v1317
      %v1319 = vpop.f32.mrf.mxu0
      %1320 = vmatprep.mubr.f32.mxu0 0.0
      %1321 = vmatmul.mubr.f32.gmra.mxu0 %v1227
      %v1322 = vpop.f32.mrf.mxu0
      %v1323 = vadd.f32 %v377, %v1322
      %v1324 = vpop.f32.mrf.mxu0
      %1325 = vmatprep.mubr.f32.mxu0 0.0
      %1326 = vmatmul.mubr.f32.gmra.mxu0 %v1229
      %v1327 = vpop.f32.mrf.mxu0
      %v1328 = vadd.f32 %v378, %v1327
      %v1329 = vpop.f32.mrf.mxu0
      %1330 = vdwg.mxu0
      %v1331 = vsel %vm510, %v1308, -inf
      %1332 = vmax.xlane.f32.xlu0 %v1331
      %v1333 = vpop.xlane.xlu0 %1332
      %v1334 = vsel %vm510, %v1313, -inf
      %1335 = vmax.xlane.f32.xlu0 %v1334
      %v1336 = vpop.xlane.xlu0 %1335
      %v1337 = vsel %vm510, %v1318, -inf
      %1338 = vmax.xlane.f32.xlu0 %v1337
      %v1339 = vpop.xlane.xlu0 %1338
      %v1340 = vsel %vm510, %v1323, -inf
      %1341 = vmax.xlane.f32.xlu0 %v1340
      %v1342 = vpop.xlane.xlu0 %1341
      %v1343 = vsel %vm510, %v1328, -inf
      %1344 = vmax.xlane.f32.xlu0 %v1343
      %v1345 = vpop.xlane.xlu0 %1344
      %v1346 = vsub.f32 %v1308, %v1333
      %v1347 = vsub.f32 %v1313, %v1336
      %v1348 = vsub.f32 %v1318, %v1339
      %v1349 = vsub.f32 %v1323, %v1342
      %v1350 = vsub.f32 %v1328, %v1345
      %v1351 = vmul.f32 %v1346, 1.442695
      %v1352 = vpow.pop %v1351
      %v1353 = vmul.f32 %v1347, 1.442695
      %v1354 = vpow.pop %v1353
      %v1355 = vmul.f32 %v1348, 1.442695
      %v1356 = vpow.pop %v1355
      %v1357 = vmul.f32 %v1349, 1.442695
      %v1358 = vpow.pop %v1357
      %v1359 = vmul.f32 %v1350, 1.442695
      %v1360 = vpow.pop %v1359
      %v1361 = vsel %vm510, %v1352, 0.0
      %1362 = vadd.xlane.f32.xlu0 %v1361
      %v1363 = vpop.xlane.xlu0 %1362
      %v1364 = vsel %vm510, %v1354, 0.0
      %1365 = vadd.xlane.f32.xlu0 %v1364
      %v1366 = vpop.xlane.xlu0 %1365
      %v1367 = vsel %vm510, %v1356, 0.0
      %1368 = vadd.xlane.f32.xlu0 %v1367
      %v1369 = vpop.xlane.xlu0 %1368
      %v1370 = vsel %vm510, %v1358, 0.0
      %1371 = vadd.xlane.f32.xlu0 %v1370
      %v1372 = vpop.xlane.xlu0 %1371
      %v1373 = vsel %vm510, %v1360, 0.0
      %1374 = vadd.xlane.f32.xlu0 %v1373
      %v1375 = vpop.xlane.xlu0 %1374
      %v1376 = vrcp.pop %v1363
      %v1377 = vrcp.pop %v1366
      %v1378 = vrcp.pop %v1369
      %v1379 = vrcp.pop %v1372
      %v1380 = vrcp.pop %v1375
      %v1381 = vmul.f32 %v1352, %v1376
      %v1382 = vmul.f32 %v1354, %v1377
      %v1383 = vmul.f32 %v1356, %v1378
      %v1384 = vmul.f32 %v1358, %v1379
      %v1385 = vmul.f32 %v1360, %v1380
      %1386 = vrot.lane.b32.xlu0 %v351, 48
      %v1387 = vpop.permute.xlu0 %1386
      %1388 = vrot.lane.b32.xlu0 %v356, 48
      %v1389 = vpop.permute.xlu0 %1388
      %1390 = vrot.lane.b32.xlu0 %v361, 48
      %v1391 = vpop.permute.xlu0 %1390
      %1392 = vrot.lane.b32.xlu0 %v366, 48
      %v1393 = vpop.permute.xlu0 %1392
      %1394 = vrot.lane.b32.xlu0 %v371, 48
      %v1395 = vpop.permute.xlu0 %1394
      %v1402 = vsel %vm510, %v1381, 0
      %v1405 = vsel %vm510, %v1382, 0
      %v1408 = vsel %vm510, %v1383, 0
      %v1411 = vsel %vm510, %v1384, 0
      %v1414 = vsel %vm510, %v1385, 0
      %1416 = vmatprep.subr.mxu0 0.0
      %1417 = vmatpush1.msra.mxu0 0.0
      %1418 = vmatprep.subr.mxu0 0.0
      %1419 = vmatpush1.msra.mxu0 0.0
      %1420 = vmatprep.subr.mxu0 0.0
      %1421 = vmatpush1.msra.mxu0 0.0
      %1422 = vmatprep.subr.mxu0 0.0
      %1423 = vmatpush1.msra.mxu0 0.0
      %1424 = vmatprep.subr.mxu0 0.0
      %1425 = vmatpush1.msra.mxu0 0.0
      %1426 = vmatprep.subr.mxu0 0.0
      %1427 = vmatpush1.msra.mxu0 0.0
      %1428 = vmatprep.subr.mxu0 0.0
      %1429 = vmatpush1.msra.mxu0 0.0
      %1430 = vmatprep.subr.mxu0 0.0
      %1431 = vmatpush1.msra.mxu0 0.0
      %1432 = vmatprep.subr.mxu0 0.0
      %1433 = vmatpush1.msra.mxu0 0.0
      %1434 = vmatprep.subr.mxu0 0.0
      %1435 = vmatpush1.msra.mxu0 0.0
      %1436 = vmatprep.subr.mxu0 0.0
      %1437 = vmatpush1.msra.mxu0 0.0
      %1438 = vmatprep.subr.mxu0 0.0
      %1439 = vmatpush1.msra.mxu0 %v1395
      %1440 = vmatprep.subr.mxu0 0.0
      %1441 = vmatpush1.msra.mxu0 %v1393
      %1442 = vmatprep.subr.mxu0 0.0
      %1443 = vmatpush1.msra.mxu0 %v1391
      %1444 = vmatprep.subr.mxu0 0.0
      %1445 = vmatpush1.msra.mxu0 %v1389
      %1446 = vmatprep.subr.mxu0 0.0
      %1447 = vmatpush1.msra.mxu0 %v1387
      %1448 = vmatprep.subr.mxu0 0.0
      %1449 = vmatpush2.msra.mxu0 0.0
      %1450 = vmatprep.subr.mxu0 0.0
      %1451 = vmatpush2.msra.mxu0 0.0
      %1452 = vmatprep.subr.mxu0 0.0
      %1453 = vmatpush2.msra.mxu0 0.0
      %1454 = vmatprep.subr.mxu0 0.0
      %1455 = vmatpush2.msra.mxu0 0.0
      %1456 = vmatprep.subr.mxu0 0.0
      %1457 = vmatpush2.msra.mxu0 0.0
      %1458 = vmatprep.subr.mxu0 0.0
      %1459 = vmatpush2.msra.mxu0 0.0
      %1460 = vmatprep.subr.mxu0 0.0
      %1461 = vmatpush2.msra.mxu0 0.0
      %1462 = vmatprep.subr.mxu0 0.0
      %1463 = vmatpush2.msra.mxu0 0.0
      %1464 = vmatprep.subr.mxu0 0.0
      %1465 = vmatpush2.msra.mxu0 0.0
      %1466 = vmatprep.subr.mxu0 0.0
      %1467 = vmatpush2.msra.mxu0 0.0
      %1468 = vmatprep.subr.mxu0 0.0
      %1469 = vmatpush2.msra.mxu0 0.0
      %1470 = vmatprep.subr.mxu0 0.0
      %1471 = vmatpush2.msra.mxu0 0.0
      %1472 = vmatprep.subr.mxu0 0.0
      %1473 = vmatpush2.msra.mxu0 0.0
      %1474 = vmatprep.subr.mxu0 0.0
      %1475 = vmatpush2.msra.mxu0 0.0
      %1476 = vmatprep.subr.mxu0 0.0
      %1477 = vmatpush2.msra.mxu0 0.0
      %1478 = vmatprep.subr.mxu0 0.0
      %1479 = vmatpush2.msra.mxu0 0.0
      %1480 = vmatprep.mubr.f32.mxu0 0.0
      %1481 = vmatmul.mubr.f32.gmra.mxu0 %v1402
      %v1482 = vpop.f32.mrf.mxu0
      %v1483 = vadd.f32 0.0, %v1482
      %v1484 = vpop.f32.mrf.mxu0
      %1485 = vmatprep.mubr.f32.mxu0 0.0
      %1486 = vmatmul.mubr.f32.gmra.mxu0 %v1405
      %v1487 = vpop.f32.mrf.mxu0
      %v1488 = vadd.f32 0.0, %v1487
      %v1489 = vpop.f32.mrf.mxu0
      %1490 = vmatprep.mubr.f32.mxu0 0.0
      %1491 = vmatmul.mubr.f32.gmra.mxu0 %v1408
      %v1492 = vpop.f32.mrf.mxu0
      %v1493 = vadd.f32 0.0, %v1492
      %v1494 = vpop.f32.mrf.mxu0
      %1495 = vmatprep.mubr.f32.mxu0 0.0
      %1496 = vmatmul.mubr.f32.gmra.mxu0 %v1411
      %v1497 = vpop.f32.mrf.mxu0
      %v1498 = vadd.f32 0.0, %v1497
      %v1499 = vpop.f32.mrf.mxu0
      %1500 = vmatprep.mubr.f32.mxu0 0.0
      %1501 = vmatmul.mubr.f32.gmra.mxu0 %v1414
      %v1502 = vpop.f32.mrf.mxu0
      %v1503 = vadd.f32 0.0, %v1502
      %v1504 = vpop.f32.mrf.mxu0
      %1505 = vdwg.mxu0
      %v1507 = vsel %vm399, %v1483, 0
      %v1510 = vsel %vm399, %v1488, 0
      %v1513 = vsel %vm399, %v1493, 0
      %v1516 = vsel %vm399, %v1498, 0
      %v1519 = vsel %vm399, %v1503, 0
      %1521 = vmatprep.subr.mxu0 0.0
      %1522 = vmatpush1.msra.mxu0 0.0
      %1523 = vmatprep.subr.mxu0 0.0
      %1524 = vmatpush1.msra.mxu0 0.0
      %1525 = vmatprep.subr.mxu0 0.0
      %1526 = vmatpush1.msra.mxu0 0.0
      %1527 = vmatprep.subr.mxu0 0.0
      %1528 = vmatpush1.msra.mxu0 0.0
      %1529 = vmatprep.subr.mxu0 0.0
      %1530 = vmatpush1.msra.mxu0 0.0
      %1531 = vmatprep.subr.mxu0 0.0
      %1532 = vmatpush1.msra.mxu0 0.0
      %1533 = vmatprep.subr.mxu0 0.0
      %1534 = vmatpush1.msra.mxu0 0.0
      %1535 = vmatprep.subr.mxu0 0.0
      %1536 = vmatpush1.msra.mxu0 0.0
      %1537 = vmatprep.subr.mxu0 0.0
      %1538 = vmatpush1.msra.mxu0 0.0
      %1539 = vmatprep.subr.mxu0 0.0
      %1540 = vmatpush1.msra.mxu0 0.0
      %1541 = vmatprep.subr.mxu0 0.0
      %1542 = vmatpush1.msra.mxu0 0.0
      %1543 = vmatprep.subr.mxu0 0.0
      %1544 = vmatpush1.msra.mxu0 0.0
      %1545 = vmatprep.subr.mxu0 0.0
      %1546 = vmatpush1.msra.mxu0 0.0
      %1547 = vmatprep.subr.mxu0 0.0
      %1548 = vmatpush1.msra.mxu0 0.0
      %1549 = vmatprep.subr.mxu0 0.0
      %1550 = vmatpush1.msra.mxu0 0.0
      %1551 = vmatprep.subr.mxu0 0.0
      %1552 = vmatpush1.msra.mxu0 %v381
      %1553 = vmatprep.subr.mxu0 0.0
      %1554 = vmatpush2.msra.mxu0 0.0
      %1555 = vmatprep.subr.mxu0 0.0
      %1556 = vmatpush2.msra.mxu0 0.0
      %1557 = vmatprep.subr.mxu0 0.0
      %1558 = vmatpush2.msra.mxu0 0.0
      %1559 = vmatprep.subr.mxu0 0.0
      %1560 = vmatpush2.msra.mxu0 0.0
      %1561 = vmatprep.subr.mxu0 0.0
      %1562 = vmatpush2.msra.mxu0 0.0
      %1563 = vmatprep.subr.mxu0 0.0
      %1564 = vmatpush2.msra.mxu0 0.0
      %1565 = vmatprep.subr.mxu0 0.0
      %1566 = vmatpush2.msra.mxu0 0.0
      %1567 = vmatprep.subr.mxu0 0.0
      %1568 = vmatpush2.msra.mxu0 0.0
      %1569 = vmatprep.subr.mxu0 0.0
      %1570 = vmatpush2.msra.mxu0 0.0
      %1571 = vmatprep.subr.mxu0 0.0
      %1572 = vmatpush2.msra.mxu0 0.0
      %1573 = vmatprep.subr.mxu0 0.0
      %1574 = vmatpush2.msra.mxu0 0.0
      %1575 = vmatprep.subr.mxu0 0.0
      %1576 = vmatpush2.msra.mxu0 0.0
      %1577 = vmatprep.subr.mxu0 0.0
      %1578 = vmatpush2.msra.mxu0 0.0
      %1579 = vmatprep.subr.mxu0 0.0
      %1580 = vmatpush2.msra.mxu0 0.0
      %1581 = vmatprep.subr.mxu0 0.0
      %1582 = vmatpush2.msra.mxu0 0.0
      %1583 = vmatprep.subr.mxu0 0.0
      %1584 = vmatpush2.msra.mxu0 0.0
      %1585 = vmatprep.mubr.f32.mxu0 0.0
      %1586 = vmatmul.mubr.f32.gmra.mxu0 %v1507
      %v1587 = vpop.f32.mrf.mxu0
      %v1588 = vadd.f32 0.0, %v1587
      %v1589 = vpop.f32.mrf.mxu0
      %1590 = vmatprep.mubr.f32.mxu0 0.0
      %1591 = vmatmul.mubr.f32.gmra.mxu0 %v1510
      %v1592 = vpop.f32.mrf.mxu0
      %v1593 = vadd.f32 0.0, %v1592
      %v1594 = vpop.f32.mrf.mxu0
      %1595 = vmatprep.mubr.f32.mxu0 0.0
      %1596 = vmatmul.mubr.f32.gmra.mxu0 %v1513
      %v1597 = vpop.f32.mrf.mxu0
      %v1598 = vadd.f32 0.0, %v1597
      %v1599 = vpop.f32.mrf.mxu0
      %1600 = vmatprep.mubr.f32.mxu0 0.0
      %1601 = vmatmul.mubr.f32.gmra.mxu0 %v1516
      %v1602 = vpop.f32.mrf.mxu0
      %v1603 = vadd.f32 0.0, %v1602
      %v1604 = vpop.f32.mrf.mxu0
      %1605 = vmatprep.mubr.f32.mxu0 0.0
      %1606 = vmatmul.mubr.f32.gmra.mxu0 %v1519
      %v1607 = vpop.f32.mrf.mxu0
      %v1608 = vadd.f32 0.0, %v1607
      %v1609 = vpop.f32.mrf.mxu0
      %1610 = vdwg.mxu0
      %v1611 = vadd.f32 %v1178, %v1588
      %v1612 = vadd.f32 %v1183, %v1593
      %v1613 = vadd.f32 %v1188, %v1598
      %v1614 = vadd.f32 %v1193, %v1603
      %v1615 = vadd.f32 %v1198, %v1608
      %1616 = vrot.lane.b32.xlu0 %v351, 104
      %v1617 = vpop.permute.xlu0 %1616
      %1618 = vrot.lane.b32.xlu0 %v356, 104
      %v1619 = vpop.permute.xlu0 %1618
      %1620 = vrot.lane.b32.xlu0 %v361, 104
      %v1621 = vpop.permute.xlu0 %1620
      %1622 = vrot.lane.b32.xlu0 %v366, 104
      %v1623 = vpop.permute.xlu0 %1622
      %1624 = vrot.lane.b32.xlu0 %v371, 104
      %v1625 = vpop.permute.xlu0 %1624
      %1626 = vrot.lane.b32.xlu0 %v351, 72
      %v1627 = vpop.permute.xlu0 %1626
      %1628 = vrot.lane.b32.xlu0 %v356, 72
      %v1629 = vpop.permute.xlu0 %1628
      %1630 = vrot.lane.b32.xlu0 %v361, 72
      %v1631 = vpop.permute.xlu0 %1630
      %1632 = vrot.lane.b32.xlu0 %v366, 72
      %v1633 = vpop.permute.xlu0 %1632
      %1634 = vrot.lane.b32.xlu0 %v371, 72
      %v1635 = vpop.permute.xlu0 %1634
      %v1636 = vsel %vm399, %v1617, 0
      %v1638 = vsel %vm399, %v1619, 0
      %v1640 = vsel %vm399, %v1621, 0
      %v1642 = vsel %vm399, %v1623, 0
      %v1644 = vsel %vm399, %v1625, 0
      %v1646 = vsel %vm399, %v1627, 0
      %v1648 = vsel %vm399, %v1629, 0
      %v1650 = vsel %vm399, %v1631, 0
      %v1652 = vsel %vm399, %v1633, 0
      %v1654 = vsel %vm399, %v1635, 0
      %1656 = vmatprep.subr.mxu0 0.0
      %1657 = vmatpush1.xpose.msra.mxu0 0.0
      %1658 = vmatprep.subr.mxu0 0.0
      %1659 = vmatpush1.xpose.msra.mxu0 0.0
      %1660 = vmatprep.subr.mxu0 0.0
      %1661 = vmatpush1.xpose.msra.mxu0 0.0
      %1662 = vmatprep.subr.mxu0 0.0
      %1663 = vmatpush1.xpose.msra.mxu0 0.0
      %1664 = vmatprep.subr.mxu0 0.0
      %1665 = vmatpush1.xpose.msra.mxu0 0.0
      %1666 = vmatprep.subr.mxu0 0.0
      %1667 = vmatpush1.xpose.msra.mxu0 0.0
      %1668 = vmatprep.subr.mxu0 0.0
      %1669 = vmatpush1.xpose.msra.mxu0 0.0
      %1670 = vmatprep.subr.mxu0 0.0
      %1671 = vmatpush1.xpose.msra.mxu0 0.0
      %1672 = vmatprep.subr.mxu0 0.0
      %1673 = vmatpush1.xpose.msra.mxu0 0.0
      %1674 = vmatprep.subr.mxu0 0.0
      %1675 = vmatpush1.xpose.msra.mxu0 0.0
      %1676 = vmatprep.subr.mxu0 0.0
      %1677 = vmatpush1.xpose.msra.mxu0 0.0
      %1678 = vmatprep.subr.mxu0 0.0
      %1679 = vmatpush1.xpose.msra.mxu0 %v1654
      %1680 = vmatprep.subr.mxu0 0.0
      %1681 = vmatpush1.xpose.msra.mxu0 %v1652
      %1682 = vmatprep.subr.mxu0 0.0
      %1683 = vmatpush1.xpose.msra.mxu0 %v1650
      %1684 = vmatprep.subr.mxu0 0.0
      %1685 = vmatpush1.xpose.msra.mxu0 %v1648
      %1686 = vmatprep.subr.mxu0 0.0
      %1687 = vmatpush1.xpose.msra.mxu0 %v1646
      %1688 = vmatprep.subr.mxu0 0.0
      %1689 = vmatpush2.xpose.msra.mxu0 0.0
      %1690 = vmatprep.subr.mxu0 0.0
      %1691 = vmatpush2.xpose.msra.mxu0 0.0
      %1692 = vmatprep.subr.mxu0 0.0
      %1693 = vmatpush2.xpose.msra.mxu0 0.0
      %1694 = vmatprep.subr.mxu0 0.0
      %1695 = vmatpush2.xpose.msra.mxu0 0.0
      %1696 = vmatprep.subr.mxu0 0.0
      %1697 = vmatpush2.xpose.msra.mxu0 0.0
      %1698 = vmatprep.subr.mxu0 0.0
      %1699 = vmatpush2.xpose.msra.mxu0 0.0
      %1700 = vmatprep.subr.mxu0 0.0
      %1701 = vmatpush2.xpose.msra.mxu0 0.0
      %1702 = vmatprep.subr.mxu0 0.0
      %1703 = vmatpush2.xpose.msra.mxu0 0.0
      %1704 = vmatprep.subr.mxu0 0.0
      %1705 = vmatpush2.xpose.msra.mxu0 0.0
      %1706 = vmatprep.subr.mxu0 0.0
      %1707 = vmatpush2.xpose.msra.mxu0 0.0
      %1708 = vmatprep.subr.mxu0 0.0
      %1709 = vmatpush2.xpose.msra.mxu0 0.0
      %1710 = vmatprep.subr.mxu0 0.0
      %1711 = vmatpush2.xpose.msra.mxu0 0.0
      %1712 = vmatprep.subr.mxu0 0.0
      %1713 = vmatpush2.xpose.msra.mxu0 0.0
      %1714 = vmatprep.subr.mxu0 0.0
      %1715 = vmatpush2.xpose.msra.mxu0 0.0
      %1716 = vmatprep.subr.mxu0 0.0
      %1717 = vmatpush2.xpose.msra.mxu0 0.0
      %1718 = vmatprep.subr.mxu0 0.0
      %1719 = vmatpush2.xpose.msra.mxu0 0.0
      %1720 = vmatprep.mubr.f32.mxu0 0.0
      %1721 = vmatmul.mubr.f32.gmra.mxu0 %v1636
      %v1722 = vpop.f32.mrf.mxu0
      %v1723 = vadd.f32 %v374, %v1722
      %v1724 = vpop.f32.mrf.mxu0
      %1725 = vmatprep.mubr.f32.mxu0 0.0
      %1726 = vmatmul.mubr.f32.gmra.mxu0 %v1638
      %v1727 = vpop.f32.mrf.mxu0
      %v1728 = vadd.f32 %v375, %v1727
      %v1729 = vpop.f32.mrf.mxu0
      %1730 = vmatprep.mubr.f32.mxu0 0.0
      %1731 = vmatmul.mubr.f32.gmra.mxu0 %v1640
      %v1732 = vpop.f32.mrf.mxu0
      %v1733 = vadd.f32 %v376, %v1732
      %v1734 = vpop.f32.mrf.mxu0
      %1735 = vmatprep.mubr.f32.mxu0 0.0
      %1736 = vmatmul.mubr.f32.gmra.mxu0 %v1642
      %v1737 = vpop.f32.mrf.mxu0
      %v1738 = vadd.f32 %v377, %v1737
      %v1739 = vpop.f32.mrf.mxu0
      %1740 = vmatprep.mubr.f32.mxu0 0.0
      %1741 = vmatmul.mubr.f32.gmra.mxu0 %v1644
      %v1742 = vpop.f32.mrf.mxu0
      %v1743 = vadd.f32 %v378, %v1742
      %v1744 = vpop.f32.mrf.mxu0
      %1745 = vdwg.mxu0
      %v1746 = vsel %vm510, %v1723, -inf
      %1747 = vmax.xlane.f32.xlu0 %v1746
      %v1748 = vpop.xlane.xlu0 %1747
      %v1749 = vsel %vm510, %v1728, -inf
      %1750 = vmax.xlane.f32.xlu0 %v1749
      %v1751 = vpop.xlane.xlu0 %1750
      %v1752 = vsel %vm510, %v1733, -inf
      %1753 = vmax.xlane.f32.xlu0 %v1752
      %v1754 = vpop.xlane.xlu0 %1753
      %v1755 = vsel %vm510, %v1738, -inf
      %1756 = vmax.xlane.f32.xlu0 %v1755
      %v1757 = vpop.xlane.xlu0 %1756
      %v1758 = vsel %vm510, %v1743, -inf
      %1759 = vmax.xlane.f32.xlu0 %v1758
      %v1760 = vpop.xlane.xlu0 %1759
      %v1761 = vsub.f32 %v1723, %v1748
      %v1762 = vsub.f32 %v1728, %v1751
      %v1763 = vsub.f32 %v1733, %v1754
      %v1764 = vsub.f32 %v1738, %v1757
      %v1765 = vsub.f32 %v1743, %v1760
      %v1766 = vmul.f32 %v1761, 1.442695
      %v1767 = vpow.pop %v1766
      %v1768 = vmul.f32 %v1762, 1.442695
      %v1769 = vpow.pop %v1768
      %v1770 = vmul.f32 %v1763, 1.442695
      %v1771 = vpow.pop %v1770
      %v1772 = vmul.f32 %v1764, 1.442695
      %v1773 = vpow.pop %v1772
      %v1774 = vmul.f32 %v1765, 1.442695
      %v1775 = vpow.pop %v1774
      %v1776 = vsel %vm510, %v1767, 0.0
      %1777 = vadd.xlane.f32.xlu0 %v1776
      %v1778 = vpop.xlane.xlu0 %1777
      %v1779 = vsel %vm510, %v1769, 0.0
      %1780 = vadd.xlane.f32.xlu0 %v1779
      %v1781 = vpop.xlane.xlu0 %1780
      %v1782 = vsel %vm510, %v1771, 0.0
      %1783 = vadd.xlane.f32.xlu0 %v1782
      %v1784 = vpop.xlane.xlu0 %1783
      %v1785 = vsel %vm510, %v1773, 0.0
      %1786 = vadd.xlane.f32.xlu0 %v1785
      %v1787 = vpop.xlane.xlu0 %1786
      %v1788 = vsel %vm510, %v1775, 0.0
      %1789 = vadd.xlane.f32.xlu0 %v1788
      %v1790 = vpop.xlane.xlu0 %1789
      %v1791 = vrcp.pop %v1778
      %v1792 = vrcp.pop %v1781
      %v1793 = vrcp.pop %v1784
      %v1794 = vrcp.pop %v1787
      %v1795 = vrcp.pop %v1790
      %v1796 = vmul.f32 %v1767, %v1791
      %v1797 = vmul.f32 %v1769, %v1792
      %v1798 = vmul.f32 %v1771, %v1793
      %v1799 = vmul.f32 %v1773, %v1794
      %v1800 = vmul.f32 %v1775, %v1795
      %1801 = vrot.lane.b32.xlu0 %v351, 40
      %v1802 = vpop.permute.xlu0 %1801
      %1803 = vrot.lane.b32.xlu0 %v356, 40
      %v1804 = vpop.permute.xlu0 %1803
      %1805 = vrot.lane.b32.xlu0 %v361, 40
      %v1806 = vpop.permute.xlu0 %1805
      %1807 = vrot.lane.b32.xlu0 %v366, 40
      %v1808 = vpop.permute.xlu0 %1807
      %1809 = vrot.lane.b32.xlu0 %v371, 40
      %v1810 = vpop.permute.xlu0 %1809
      %v1817 = vsel %vm510, %v1796, 0
      %v1820 = vsel %vm510, %v1797, 0
      %v1823 = vsel %vm510, %v1798, 0
      %v1826 = vsel %vm510, %v1799, 0
      %v1829 = vsel %vm510, %v1800, 0
      %1831 = vmatprep.subr.mxu0 0.0
      %1832 = vmatpush1.msra.mxu0 0.0
      %1833 = vmatprep.subr.mxu0 0.0
      %1834 = vmatpush1.msra.mxu0 0.0
      %1835 = vmatprep.subr.mxu0 0.0
      %1836 = vmatpush1.msra.mxu0 0.0
      %1837 = vmatprep.subr.mxu0 0.0
      %1838 = vmatpush1.msra.mxu0 0.0
      %1839 = vmatprep.subr.mxu0 0.0
      %1840 = vmatpush1.msra.mxu0 0.0
      %1841 = vmatprep.subr.mxu0 0.0
      %1842 = vmatpush1.msra.mxu0 0.0
      %1843 = vmatprep.subr.mxu0 0.0
      %1844 = vmatpush1.msra.mxu0 0.0
      %1845 = vmatprep.subr.mxu0 0.0
      %1846 = vmatpush1.msra.mxu0 0.0
      %1847 = vmatprep.subr.mxu0 0.0
      %1848 = vmatpush1.msra.mxu0 0.0
      %1849 = vmatprep.subr.mxu0 0.0
      %1850 = vmatpush1.msra.mxu0 0.0
      %1851 = vmatprep.subr.mxu0 0.0
      %1852 = vmatpush1.msra.mxu0 0.0
      %1853 = vmatprep.subr.mxu0 0.0
      %1854 = vmatpush1.msra.mxu0 %v1810
      %1855 = vmatprep.subr.mxu0 0.0
      %1856 = vmatpush1.msra.mxu0 %v1808
      %1857 = vmatprep.subr.mxu0 0.0
      %1858 = vmatpush1.msra.mxu0 %v1806
      %1859 = vmatprep.subr.mxu0 0.0
      %1860 = vmatpush1.msra.mxu0 %v1804
      %1861 = vmatprep.subr.mxu0 0.0
      %1862 = vmatpush1.msra.mxu0 %v1802
      %1863 = vmatprep.subr.mxu0 0.0
      %1864 = vmatpush2.msra.mxu0 0.0
      %1865 = vmatprep.subr.mxu0 0.0
      %1866 = vmatpush2.msra.mxu0 0.0
      %1867 = vmatprep.subr.mxu0 0.0
      %1868 = vmatpush2.msra.mxu0 0.0
      %1869 = vmatprep.subr.mxu0 0.0
      %1870 = vmatpush2.msra.mxu0 0.0
      %1871 = vmatprep.subr.mxu0 0.0
      %1872 = vmatpush2.msra.mxu0 0.0
      %1873 = vmatprep.subr.mxu0 0.0
      %1874 = vmatpush2.msra.mxu0 0.0
      %1875 = vmatprep.subr.mxu0 0.0
      %1876 = vmatpush2.msra.mxu0 0.0
      %1877 = vmatprep.subr.mxu0 0.0
      %1878 = vmatpush2.msra.mxu0 0.0
      %1879 = vmatprep.subr.mxu0 0.0
      %1880 = vmatpush2.msra.mxu0 0.0
      %1881 = vmatprep.subr.mxu0 0.0
      %1882 = vmatpush2.msra.mxu0 0.0
      %1883 = vmatprep.subr.mxu0 0.0
      %1884 = vmatpush2.msra.mxu0 0.0
      %1885 = vmatprep.subr.mxu0 0.0
      %1886 = vmatpush2.msra.mxu0 0.0
      %1887 = vmatprep.subr.mxu0 0.0
      %1888 = vmatpush2.msra.mxu0 0.0
      %1889 = vmatprep.subr.mxu0 0.0
      %1890 = vmatpush2.msra.mxu0 0.0
      %1891 = vmatprep.subr.mxu0 0.0
      %1892 = vmatpush2.msra.mxu0 0.0
      %1893 = vmatprep.subr.mxu0 0.0
      %1894 = vmatpush2.msra.mxu0 0.0
      %1895 = vmatprep.mubr.f32.mxu0 0.0
      %1896 = vmatmul.mubr.f32.gmra.mxu0 %v1817
      %v1897 = vpop.f32.mrf.mxu0
      %v1898 = vadd.f32 0.0, %v1897
      %v1899 = vpop.f32.mrf.mxu0
      %1900 = vmatprep.mubr.f32.mxu0 0.0
      %1901 = vmatmul.mubr.f32.gmra.mxu0 %v1820
      %v1902 = vpop.f32.mrf.mxu0
      %v1903 = vadd.f32 0.0, %v1902
      %v1904 = vpop.f32.mrf.mxu0
      %1905 = vmatprep.mubr.f32.mxu0 0.0
      %1906 = vmatmul.mubr.f32.gmra.mxu0 %v1823
      %v1907 = vpop.f32.mrf.mxu0
      %v1908 = vadd.f32 0.0, %v1907
      %v1909 = vpop.f32.mrf.mxu0
      %1910 = vmatprep.mubr.f32.mxu0 0.0
      %1911 = vmatmul.mubr.f32.gmra.mxu0 %v1826
      %v1912 = vpop.f32.mrf.mxu0
      %v1913 = vadd.f32 0.0, %v1912
      %v1914 = vpop.f32.mrf.mxu0
      %1915 = vmatprep.mubr.f32.mxu0 0.0
      %1916 = vmatmul.mubr.f32.gmra.mxu0 %v1829
      %v1917 = vpop.f32.mrf.mxu0
      %v1918 = vadd.f32 0.0, %v1917
      %v1919 = vpop.f32.mrf.mxu0
      %1920 = vdwg.mxu0
      %v1922 = vsel %vm399, %v1898, 0
      %v1925 = vsel %vm399, %v1903, 0
      %v1928 = vsel %vm399, %v1908, 0
      %v1931 = vsel %vm399, %v1913, 0
      %v1934 = vsel %vm399, %v1918, 0
      %1936 = vmatprep.subr.mxu0 0.0
      %1937 = vmatpush1.msra.mxu0 0.0
      %1938 = vmatprep.subr.mxu0 0.0
      %1939 = vmatpush1.msra.mxu0 0.0
      %1940 = vmatprep.subr.mxu0 0.0
      %1941 = vmatpush1.msra.mxu0 0.0
      %1942 = vmatprep.subr.mxu0 0.0
      %1943 = vmatpush1.msra.mxu0 0.0
      %1944 = vmatprep.subr.mxu0 0.0
      %1945 = vmatpush1.msra.mxu0 0.0
      %1946 = vmatprep.subr.mxu0 0.0
      %1947 = vmatpush1.msra.mxu0 0.0
      %1948 = vmatprep.subr.mxu0 0.0
      %1949 = vmatpush1.msra.mxu0 0.0
      %1950 = vmatprep.subr.mxu0 0.0
      %1951 = vmatpush1.msra.mxu0 0.0
      %1952 = vmatprep.subr.mxu0 0.0
      %1953 = vmatpush1.msra.mxu0 0.0
      %1954 = vmatprep.subr.mxu0 0.0
      %1955 = vmatpush1.msra.mxu0 0.0
      %1956 = vmatprep.subr.mxu0 0.0
      %1957 = vmatpush1.msra.mxu0 0.0
      %1958 = vmatprep.subr.mxu0 0.0
      %1959 = vmatpush1.msra.mxu0 0.0
      %1960 = vmatprep.subr.mxu0 0.0
      %1961 = vmatpush1.msra.mxu0 0.0
      %1962 = vmatprep.subr.mxu0 0.0
      %1963 = vmatpush1.msra.mxu0 0.0
      %1964 = vmatprep.subr.mxu0 0.0
      %1965 = vmatpush1.msra.mxu0 0.0
      %1966 = vmatprep.subr.mxu0 0.0
      %1967 = vmatpush1.msra.mxu0 %v382
      %1968 = vmatprep.subr.mxu0 0.0
      %1969 = vmatpush2.msra.mxu0 0.0
      %1970 = vmatprep.subr.mxu0 0.0
      %1971 = vmatpush2.msra.mxu0 0.0
      %1972 = vmatprep.subr.mxu0 0.0
      %1973 = vmatpush2.msra.mxu0 0.0
      %1974 = vmatprep.subr.mxu0 0.0
      %1975 = vmatpush2.msra.mxu0 0.0
      %1976 = vmatprep.subr.mxu0 0.0
      %1977 = vmatpush2.msra.mxu0 0.0
      %1978 = vmatprep.subr.mxu0 0.0
      %1979 = vmatpush2.msra.mxu0 0.0
      %1980 = vmatprep.subr.mxu0 0.0
      %1981 = vmatpush2.msra.mxu0 0.0
      %1982 = vmatprep.subr.mxu0 0.0
      %1983 = vmatpush2.msra.mxu0 0.0
      %1984 = vmatprep.subr.mxu0 0.0
      %1985 = vmatpush2.msra.mxu0 0.0
      %1986 = vmatprep.subr.mxu0 0.0
      %1987 = vmatpush2.msra.mxu0 0.0
      %1988 = vmatprep.subr.mxu0 0.0
      %1989 = vmatpush2.msra.mxu0 0.0
      %1990 = vmatprep.subr.mxu0 0.0
      %1991 = vmatpush2.msra.mxu0 0.0
      %1992 = vmatprep.subr.mxu0 0.0
      %1993 = vmatpush2.msra.mxu0 0.0
      %1994 = vmatprep.subr.mxu0 0.0
      %1995 = vmatpush2.msra.mxu0 0.0
      %1996 = vmatprep.subr.mxu0 0.0
      %1997 = vmatpush2.msra.mxu0 0.0
      %1998 = vmatprep.subr.mxu0 0.0
      %1999 = vmatpush2.msra.mxu0 0.0
      %2000 = vmatprep.mubr.f32.mxu0 0.0
      %2001 = vmatmul.mubr.f32.gmra.mxu0 %v1922
      %v2002 = vpop.f32.mrf.mxu0
      %v2003 = vadd.f32 0.0, %v2002
      %v2004 = vpop.f32.mrf.mxu0
      %2005 = vmatprep.mubr.f32.mxu0 0.0
      %2006 = vmatmul.mubr.f32.gmra.mxu0 %v1925
      %v2007 = vpop.f32.mrf.mxu0
      %v2008 = vadd.f32 0.0, %v2007
      %v2009 = vpop.f32.mrf.mxu0
      %2010 = vmatprep.mubr.f32.mxu0 0.0
      %2011 = vmatmul.mubr.f32.gmra.mxu0 %v1928
      %v2012 = vpop.f32.mrf.mxu0
      %v2013 = vadd.f32 0.0, %v2012
      %v2014 = vpop.f32.mrf.mxu0
      %2015 = vmatprep.mubr.f32.mxu0 0.0
      %2016 = vmatmul.mubr.f32.gmra.mxu0 %v1931
      %v2017 = vpop.f32.mrf.mxu0
      %v2018 = vadd.f32 0.0, %v2017
      %v2019 = vpop.f32.mrf.mxu0
      %2020 = vmatprep.mubr.f32.mxu0 0.0
      %2021 = vmatmul.mubr.f32.gmra.mxu0 %v1934
      %v2022 = vpop.f32.mrf.mxu0
      %v2023 = vadd.f32 0.0, %v2022
      %v2024 = vpop.f32.mrf.mxu0
      %2025 = vdwg.mxu0
      %v2026 = vadd.f32 %v1611, %v2003
      %v2027 = vadd.f32 %v1612, %v2008
      %v2028 = vadd.f32 %v1613, %v2013
      %v2029 = vadd.f32 %v1614, %v2018
      %v2030 = vadd.f32 %v1615, %v2023
      %v2032 = vlaneseq
      %v2033 = vshrl.u32 %v2032, 7
      %v2034 = vsub.s32 0, %v2033
      %v2035 = vrot.slane %v383, %v2034
      %v2037 = vadd.f32 %v2026, %v2035
      %v2038 = vadd.f32 %v2027, %v2035
      %v2039 = vadd.f32 %v2028, %v2035
      %v2040 = vadd.f32 %v2029, %v2035
      %v2041 = vadd.f32 %v2030, %v2035
      %2042 = vst.msk [vmem:[%s251] sm:$0xff] %vm268, %v2037
      %2043 = vst.msk [vmem:[%s251 + $0x8] sm:$0xff] %vm268, %v2038
      %2044 = vst.msk [vmem:[%s251 + $0x10] sm:$0xff] %vm268, %v2039
      %2045 = vst.msk [vmem:[%s251 + $0x18] sm:$0xff] %vm268, %v2040
      %2046 = vst.msk [vmem:[%s251 + $0x20] sm:$0xff] %vm268, %v2041
      %p2047 = scmp.lt.s32.totalorder %s17, 1
      %s2048 = scalar_select %p2047, %s17, 1
      %s2049 = smul.addr %s2048, 5
      %s2050 = smul.addr %s2049, 8
      %s2051 = scalar_lea.vmem %s6, %s2050
      // Predicated region
      $region45: #{tpu_custom_call.1} parent=43 // pred_check
        %p2052 = pneg %p166
      $region46: #{tpu_custom_call.1} parent=43 // pred_check_branch
        %2054 = sbr.rel (%p2052) target = $region48
      $region47: #{tpu_custom_call.1} parent=43 // pred_region
        _
      $region48: #{tpu_custom_call.1} parent=43 // pred_fallthru
        _
    $region44: #{tpu_custom_call.1} parent=5 // pred_fallthru
      _
    %p2055 = scmp.le.s32.totalorder 2, %s12
    // Predicated region
    $region49: #{tpu_custom_call.1} parent=5 // pred_check
      %p2056 = pneg %p2055
    $region50: #{tpu_custom_call.1} parent=5 // pred_check_branch
      %2058 = sbr.rel (%p2056) target = $region52
    $region51: #{tpu_custom_call.1} parent=5 // pred_region
      %s2059 = ssub.s32 %s12, 2
      // Predicated region
      $region53: #{tpu_custom_call.1} parent=51 // pred_check
        %p2060 = pneg %p172
      $region54: #{tpu_custom_call.1} parent=51 // pred_check_branch
        %2062 = sbr.rel (%p2060) target = $region56
      $region55: #{tpu_custom_call.1} parent=51 // pred_region
        %p2063 = scmp.lt.s32.totalorder %s18, 1
        %s2064 = scalar_select %p2063, %s18, 1
        %s2065 = smul.addr %s2064, 5
        %s2066 = smul.addr %s2065, 8
        %s2067 = scalar_lea.vmem %s6, %s2066
      $region56: #{tpu_custom_call.1} parent=51 // pred_fallthru
        _
    $region52: #{tpu_custom_call.1} parent=5 // pred_fallthru
      _
  $region6: #{tpu_custom_call.1} parent=0 // loop_footer
    %s16 = sadd.s32 1, %s12
  $region7: #{tpu_custom_call.1} parent=0 // loop_footer_branch
    %11 = sbr.rel target = $region3
  $region8: #{tpu_custom_call.1} parent=0 // loop_exit
    _

</llo_original>
